<compile_context>
chip_gen: v7x
topology: tpu7x:2x2x1
jax: 0.10.0
libtpu: 0.0.40
codegen_flags: <defaults>
</compile_context>

<pallas_src>
import functools

import jax
import jax.numpy as jnp
from jax.experimental import pallas as pl
from jax.experimental.pallas import tpu as pltpu

CHANNELS = 3          # RGB input channels (proggan constant)
BN_EPS = 1e-5         # PyTorch BatchNorm2d default eps
LRELU_SLOPE = 0.2


# --------------------------------------------------------------------------- #
# Kernel 1: fromRGB (1x1 conv), NCHW-native, spatial axis on lanes.
# --------------------------------------------------------------------------- #
def _from_rgb_kernel(x_ref, w_ref, b_ref, o_ref):
    # x_ref: (C, t_hw)   w_ref: (Fo, C)   b_ref: (Fo, 1)   o_ref: (Fo, t_hw)
    acc = jnp.dot(w_ref[...], x_ref[...], preferred_element_type=jnp.float32)
    o_ref[...] = (acc + b_ref[...]).astype(o_ref.dtype)


def from_rgb(x_nchw, weight, bias, *, t_hw=2048):
    """1x1 conv (fromRGB).  x: (N, C, H, W), weight: (Fo, C), bias: (Fo,)."""
    N, C, H, W = x_nchw.shape
    Fo = weight.shape[0]
    assert weight.shape[1] == C

    HW = H * W
    x_flat = x_nchw.reshape(N, C, HW)              # zero-copy NCHW view
    t_hw = HW if HW <= t_hw else t_hw              # full spatial or a 128-multiple tile
    if t_hw != HW:
        assert t_hw % 128 == 0
    b_col = bias.reshape(Fo, 1)

    itemsize = x_nchw.dtype.itemsize
    cost = pl.CostEstimate(
        flops=2 * N * HW * C * Fo,
        transcendentals=0,
        bytes_accessed=(N * C * HW + Fo * C + Fo + N * Fo * HW) * itemsize)

    out_flat = pl.pallas_call(
        _from_rgb_kernel,
        out_shape=jax.ShapeDtypeStruct((N, Fo, HW), x_nchw.dtype),
        grid_spec=pl.GridSpec(
            grid=(N, pl.cdiv(HW, t_hw)),
            in_specs=[
                pl.BlockSpec((pl.Squeezed(), C, t_hw), lambda n, j: (n, 0, j)),
                pl.BlockSpec((Fo, C), lambda n, j: (0, 0)),
                pl.BlockSpec((Fo, 1), lambda n, j: (0, 0)),
            ],
            out_specs=pl.BlockSpec((pl.Squeezed(), Fo, t_hw),
                                   lambda n, j: (n, 0, j)),
        ),
        compiler_params=pltpu.CompilerParams(
            dimension_semantics=("parallel", "parallel")),
        cost_estimate=cost,
    )(x_flat, weight, b_col)

    return out_flat.reshape(N, Fo, H, W)           # zero-copy back to NCHW


# --------------------------------------------------------------------------- #
# Kernel 2: fused 3x3 conv + bias + 2x2 max-pool + leaky_relu + BN affine.
# --------------------------------------------------------------------------- #
def _conv_pool_bn_kernel(xp_ref, w_ref, b_ref, scale_ref, shift_ref, o_ref, *,
                         wp, s_out, s_ext, neg_slope):
    # xp_ref:  (fi, Lp)   zero-padded, flattened spatial (one batch element)
    # w_ref:   (9, fo, fi) conv taps, k = 3*dh + dw
    # b/scale/shift: (fo, 1)
    # o_ref:   (fo, s_out) pooled/activated/normalized slab (valid at even h, w)
    xv = xp_ref[...]
    acc = None
    for k in range(9):                              # unrolled at trace time
        dh, dw = divmod(k, 3)
        off = dh * wp + dw                          # flat shift of this tap
        part = jnp.dot(w_ref[k], xv[:, off:off + s_ext],
                       preferred_element_type=jnp.float32)
        acc = part if acc is None else acc + part
    y = acc + b_ref[...]                            # conv3x3 + bias, (fo, s_ext)

    # 2x2 / stride-2 max-pool == max over the 4 flat shifts {0, 1, wp, wp+1};
    # only even (h, w) positions are kept by the wrapper.
    m = jnp.maximum(jnp.maximum(y[:, 0:s_out], y[:, 1:s_out + 1]),
                    jnp.maximum(y[:, wp:wp + s_out], y[:, wp + 1:wp + 1 + s_out]))
    m = jnp.where(m >= 0, m, neg_slope * m)         # leaky_relu(0.2)
    o_ref[...] = (m * scale_ref[...] + shift_ref[...]).astype(o_ref.dtype)


def conv_pool_bn(x, conv_w, conv_b, bn_scale, bn_shift):
    """conv3x3(stride 1, pad 1) + bias + maxpool2 + leaky_relu(0.2) + BN affine.

    x: (N, fi, H, W) -> (N, fo, H//2, W//2)."""
    N, fi, H, W = x.shape
    fo = conv_w.shape[0]
    assert conv_w.shape == (fo, fi, 3, 3)
    assert H % 2 == 0 and W % 2 == 0

    wp = W + 2                     # padded row pitch
    s_out = H * wp                 # slab length written per image
    s_ext = s_out + wp + 1         # extra tail so the pool shifts stay in range

    # 1 halo row/col for the conv; 2 extra zero rows at the bottom so every
    # tap slice of length s_ext is in bounds.  Flatten spatial afterwards.
    xp = jnp.pad(x, ((0, 0), (0, 0), (1, 3), (1, 1)))
    lp = (H + 4) * wp
    xp = xp.reshape(N, fi, lp)

    w_taps = jnp.transpose(conv_w, (2, 3, 0, 1)).reshape(9, fo, fi)
    b_col = conv_b.reshape(fo, 1)
    scale_col = bn_scale.reshape(fo, 1)
    shift_col = bn_shift.reshape(fo, 1)

    kernel = functools.partial(_conv_pool_bn_kernel, wp=wp, s_out=s_out,
                               s_ext=s_ext, neg_slope=LRELU_SLOPE)
    out = pl.pallas_call(
        kernel,
        out_shape=jax.ShapeDtypeStruct((N, fo, s_out), x.dtype),
        grid_spec=pl.GridSpec(
            grid=(N,),
            in_specs=[
                pl.BlockSpec((pl.Squeezed(), fi, lp), lambda n: (n, 0, 0)),
                pl.BlockSpec((9, fo, fi), lambda n: (0, 0, 0)),
                pl.BlockSpec((fo, 1), lambda n: (0, 0)),
                pl.BlockSpec((fo, 1), lambda n: (0, 0)),
                pl.BlockSpec((fo, 1), lambda n: (0, 0)),
            ],
            out_specs=pl.BlockSpec((pl.Squeezed(), fo, s_out),
                                   lambda n: (n, 0, 0)),
        ),
        compiler_params=pltpu.CompilerParams(
            dimension_semantics=("parallel",)),
    )(xp, w_taps, b_col, scale_col, shift_col)

    # Valid pooled outputs live at even (h, w): strided view back to NCHW.
    return out.reshape(N, fo, H, wp)[:, :, 0:H:2, 0:W:2]


# --------------------------------------------------------------------------- #
# DiscConv forward (RGBphase == 0, useBN=True inference stats, useDP=False).
# --------------------------------------------------------------------------- #
def disc_conv_forward(x, params):
    y = from_rgb(x, params["rgb_w"], params["rgb_b"])
    scale = params["bn_gamma"] * jax.lax.rsqrt(params["bn_var"] + BN_EPS)
    shift = params["bn_beta"] - params["bn_mean"] * scale
    return conv_pool_bn(y, params["conv_w"], params["conv_b"], scale, shift)


def init_disc_conv_params(key, fi, fo):
    """Deterministic params matching the nn.Module parameter shapes/init style."""
    ks = jax.random.split(key, 8)
    b1 = 1.0 / jnp.sqrt(jnp.float32(CHANNELS))        # Conv2d default bound
    b2 = 1.0 / jnp.sqrt(jnp.float32(fi * 3 * 3))
    return {
        "rgb_w": jax.random.uniform(ks[0], (fi, CHANNELS), jnp.float32, -b1, b1),
        "rgb_b": jax.random.uniform(ks[1], (fi,), jnp.float32, -b1, b1),
        "conv_w": jax.random.uniform(ks[2], (fo, fi, 3, 3), jnp.float32, -b2, b2),
        "conv_b": jax.random.uniform(ks[3], (fo,), jnp.float32, -b2, b2),
        # BatchNorm2d inference parameters (non-trivial so the test is meaningful).
        "bn_gamma": jax.random.uniform(ks[4], (fo,), jnp.float32, 0.5, 1.5),
        "bn_beta": jax.random.uniform(ks[5], (fo,), jnp.float32, -0.5, 0.5),
        "bn_mean": jax.random.uniform(ks[6], (fo,), jnp.float32, -0.5, 0.5),
        "bn_var": jax.random.uniform(ks[7], (fo,), jnp.float32, 0.5, 1.5),
    }


def disc_conv_ref(x, params):
    """Pure-JAX reference of the same forward semantics."""
    y = (jnp.einsum("oc,nchw->nohw", params["rgb_w"], x)
         + params["rgb_b"][None, :, None, None])
    N, fi, H, W = y.shape
    fo = params["conv_w"].shape[0]
    yp = jnp.pad(y, ((0, 0), (0, 0), (1, 1), (1, 1)))
    z = jnp.zeros((N, fo, H, W), jnp.float32)
    for dh in range(3):                 # 3x3 conv as 9 shifted 1x1 convs
        for dw in range(3):
            z = z + jnp.einsum("oc,nchw->nohw", params["conv_w"][:, :, dh, dw],
                               yp[:, :, dh:dh + H, dw:dw + W])
    z = z + params["conv_b"][None, :, None, None]
    z = z.reshape(N, fo, H // 2, 2, W // 2, 2).max(axis=(3, 5))   # maxpool 2x2
    z = jnp.where(z >= 0, z, LRELU_SLOPE * z)                     # leaky_relu
    scale = params["bn_gamma"] / jnp.sqrt(params["bn_var"] + BN_EPS)
    shift = params["bn_beta"] - params["bn_mean"] * scale
    return z * scale[None, :, None, None] + shift[None, :, None, None]


if __name__ == "__main__":
    key = jax.random.PRNGKey(0)
    k_x, k_p = jax.random.split(key)

    N, H, W = 2, 16, 16
    fi, fo = 16, 32
    x = jax.random.normal(k_x, (N, CHANNELS, H, W), jnp.float32)
    params = init_disc_conv_params(k_p, fi, fo)

    fwd = jax.jit(disc_conv_forward)
    y = jax.block_until_ready(fwd(x, params))
    assert y.shape == (N, fo, H // 2, W // 2)

    # Tolerance covers MXU pass-ordering / input-rounding differences between
    # the Pallas dots and the XLA einsum reference.
    y_ref = disc_conv_ref(x, params)
    max_err = float(jnp.max(jnp.abs(y - y_ref)))
    assert jnp.allclose(y, y_ref, atol=2e-3, rtol=2e-3), max_err

    print("KERNEL_OK")
</pallas_src>

<mosaic_0001>
module attributes {stable_mosaic.version = 11 : i64} {
  func.func @_from_rgb_kernel(%arg0: i32, %arg1: i32, %arg2: memref<1x3x256xf32, #tpu.memory_space<vmem>>, %arg3: memref<16x3xf32, #tpu.memory_space<vmem>>, %arg4: memref<16x1xf32, #tpu.memory_space<vmem>>, %arg5: memref<1x16x256xf32, #tpu.memory_space<vmem>>) attributes {dimension_semantics = [#tpu.dimension_semantics<parallel>, #tpu.dimension_semantics<parallel>], iteration_bounds = array<i64: 2, 1>, scalar_prefetch = 0 : i64, scratch_operands = 0 : i64, tpu.core_type = #tpu.core_type<tc>, window_params = [{transform_indices = @transform_0, window_bounds = array<i64: 1, 3, 256>}, {pipeline_mode = #tpu.pipeline_mode<synchronous>, transform_indices = @transform_1, window_bounds = array<i64: 16, 3>}, {pipeline_mode = #tpu.pipeline_mode<synchronous>, transform_indices = @transform_2, window_bounds = array<i64: 16, 1>}, {transform_indices = @transform_3, window_bounds = array<i64: 1, 16, 256>}]} {
    %c0 = arith.constant 0 : index
    %c0_0 = arith.constant 0 : index
    %0 = vector.load %arg3[%c0, %c0_0] : memref<16x3xf32, #tpu.memory_space<vmem>>, vector<16x3xf32>
    %c0_1 = arith.constant 0 : index
    %c0_2 = arith.constant 0 : index
    %c0_3 = arith.constant 0 : index
    %1 = vector.load %arg2[%c0_1, %c0_2, %c0_3] : memref<1x3x256xf32, #tpu.memory_space<vmem>>, vector<1x3x256xf32>
    %2 = vector.shape_cast %1 : vector<1x3x256xf32> to vector<3x256xf32>
    %cst = arith.constant dense<0.000000e+00> : vector<16x256xf32>
    %3 = tpu.matmul %0, %2, %cst {dimension_numbers = #tpu.dot_dimension_numbers<[1], [0], [0], [1], [0, 0, 1, 1], [], []>} : vector<16x3xf32>, vector<3x256xf32>, vector<16x256xf32> -> vector<16x256xf32>
    %c0_4 = arith.constant 0 : index
    %c0_5 = arith.constant 0 : index
    %4 = vector.load %arg4[%c0_4, %c0_5] : memref<16x1xf32, #tpu.memory_space<vmem>>, vector<16x1xf32>
    %5 = vector.broadcast %4 : vector<16x1xf32> to vector<16x256xf32>
    %6 = arith.addf %3, %5 : vector<16x256xf32>
    %c0_6 = arith.constant 0 : index
    %c0_7 = arith.constant 0 : index
    %c0_8 = arith.constant 0 : index
    %7 = vector.load %arg5[%c0_6, %c0_7, %c0_8] : memref<1x16x256xf32, #tpu.memory_space<vmem>>, vector<1x16x256xf32>
    %8 = vector.shape_cast %7 : vector<1x16x256xf32> to vector<16x256xf32>
    %9 = vector.shape_cast %6 : vector<16x256xf32> to vector<1x16x256xf32>
    tpu.vector_store %arg5[%c0_6, %c0_7, %c0_8], %9 {strides = array<i32>} : memref<1x16x256xf32, #tpu.memory_space<vmem>>, vector<1x16x256xf32>,
    return
  }
  func.func @transform_0(%arg0: i32, %arg1: i32) -> (i32, i32, i32) {
    %c0_i32 = arith.constant 0 : i32
    %c0_i32_0 = arith.constant 0 : i32
    return %arg0, %c0_i32, %arg1 : i32, i32, i32
  }
  func.func @transform_1(%arg0: i32, %arg1: i32) -> (i32, i32) {
    %c0_i32 = arith.constant 0 : i32
    %c0_i32_0 = arith.constant 0 : i32
    %c0_i32_1 = arith.constant 0 : i32
    return %c0_i32, %c0_i32_0 : i32, i32
  }
  func.func @transform_2(%arg0: i32, %arg1: i32) -> (i32, i32) {
    %c0_i32 = arith.constant 0 : i32
    %c0_i32_0 = arith.constant 0 : i32
    %c0_i32_1 = arith.constant 0 : i32
    return %c0_i32, %c0_i32_0 : i32, i32
  }
  func.func @transform_3(%arg0: i32, %arg1: i32) -> (i32, i32, i32) {
    %c0_i32 = arith.constant 0 : i32
    %c0_i32_0 = arith.constant 0 : i32
    return %arg0, %c0_i32, %arg1 : i32, i32, i32
  }
}

module attributes {stable_mosaic.version = 11 : i64} {
  func.func @_conv_pool_bn_kernel(%arg0: i32, %arg1: memref<1x16x360xf32, #tpu.memory_space<vmem>>, %arg2: memref<9x32x16xf32, #tpu.memory_space<vmem>>, %arg3: memref<32x1xf32, #tpu.memory_space<vmem>>, %arg4: memref<32x1xf32, #tpu.memory_space<vmem>>, %arg5: memref<32x1xf32, #tpu.memory_space<vmem>>, %arg6: memref<1x32x288xf32, #tpu.memory_space<vmem>>) attributes {dimension_semantics = [#tpu.dimension_semantics<parallel>], iteration_bounds = array<i64: 2>, scalar_prefetch = 0 : i64, scratch_operands = 0 : i64, tpu.core_type = #tpu.core_type<tc>, window_params = [{transform_indices = @transform_0, window_bounds = array<i64: 1, 16, 360>}, {pipeline_mode = #tpu.pipeline_mode<synchronous>, transform_indices = @transform_1, window_bounds = array<i64: 9, 32, 16>}, {pipeline_mode = #tpu.pipeline_mode<synchronous>, transform_indices = @transform_2, window_bounds = array<i64: 32, 1>}, {pipeline_mode = #tpu.pipeline_mode<synchronous>, transform_indices = @transform_3, window_bounds = array<i64: 32, 1>}, {pipeline_mode = #tpu.pipeline_mode<synchronous>, transform_indices = @transform_4, window_bounds = array<i64: 32, 1>}, {transform_indices = @transform_5, window_bounds = array<i64: 1, 32, 288>}]} {
    %c0 = arith.constant 0 : index
    %c0_0 = arith.constant 0 : index
    %c0_1 = arith.constant 0 : index
    %0 = vector.load %arg1[%c0, %c0_0, %c0_1] : memref<1x16x360xf32, #tpu.memory_space<vmem>>, vector<1x16x360xf32>
    %1 = vector.shape_cast %0 : vector<1x16x360xf32> to vector<16x360xf32>
    %c0_2 = arith.constant 0 : index
    %c0_3 = arith.constant 0 : index
    %c0_4 = arith.constant 0 : index
    %2 = vector.load %arg2[%c0_2, %c0_3, %c0_4] : memref<9x32x16xf32, #tpu.memory_space<vmem>>, vector<1x32x16xf32>
    %3 = vector.shape_cast %2 : vector<1x32x16xf32> to vector<32x16xf32>
    %4 = vector.extract_strided_slice %1 {offsets = [0, 0], sizes = [16, 307], strides = [1, 1]} : vector<16x360xf32> to vector<16x307xf32>
    %cst = arith.constant dense<0.000000e+00> : vector<32x307xf32>
    %5 = tpu.matmul %3, %4, %cst {dimension_numbers = #tpu.dot_dimension_numbers<[1], [0], [0], [1], [0, 0, 1, 1], [], []>} : vector<32x16xf32>, vector<16x307xf32>, vector<32x307xf32> -> vector<32x307xf32>
    %c1 = arith.constant 1 : index
    %c0_5 = arith.constant 0 : index
    %c0_6 = arith.constant 0 : index
    %6 = vector.load %arg2[%c1, %c0_5, %c0_6] : memref<9x32x16xf32, #tpu.memory_space<vmem>>, vector<1x32x16xf32>
    %7 = vector.shape_cast %6 : vector<1x32x16xf32> to vector<32x16xf32>
    %8 = vector.extract_strided_slice %1 {offsets = [0, 1], sizes = [16, 307], strides = [1, 1]} : vector<16x360xf32> to vector<16x307xf32>
    %cst_7 = arith.constant dense<0.000000e+00> : vector<32x307xf32>
    %9 = tpu.matmul %7, %8, %cst_7 {dimension_numbers = #tpu.dot_dimension_numbers<[1], [0], [0], [1], [0, 0, 1, 1], [], []>} : vector<32x16xf32>, vector<16x307xf32>, vector<32x307xf32> -> vector<32x307xf32>
    %10 = arith.addf %5, %9 : vector<32x307xf32>
    %c2 = arith.constant 2 : index
    %c0_8 = arith.constant 0 : index
    %c0_9 = arith.constant 0 : index
    %11 = vector.load %arg2[%c2, %c0_8, %c0_9] : memref<9x32x16xf32, #tpu.memory_space<vmem>>, vector<1x32x16xf32>
    %12 = vector.shape_cast %11 : vector<1x32x16xf32> to vector<32x16xf32>
    %13 = vector.extract_strided_slice %1 {offsets = [0, 2], sizes = [16, 307], strides = [1, 1]} : vector<16x360xf32> to vector<16x307xf32>
    %cst_10 = arith.constant dense<0.000000e+00> : vector<32x307xf32>
    %14 = tpu.matmul %12, %13, %cst_10 {dimension_numbers = #tpu.dot_dimension_numbers<[1], [0], [0], [1], [0, 0, 1, 1], [], []>} : vector<32x16xf32>, vector<16x307xf32>, vector<32x307xf32> -> vector<32x307xf32>
    %15 = arith.addf %10, %14 : vector<32x307xf32>
    %c3 = arith.constant 3 : index
    %c0_11 = arith.constant 0 : index
    %c0_12 = arith.constant 0 : index
    %16 = vector.load %arg2[%c3, %c0_11, %c0_12] : memref<9x32x16xf32, #tpu.memory_space<vmem>>, vector<1x32x16xf32>
    %17 = vector.shape_cast %16 : vector<1x32x16xf32> to vector<32x16xf32>
    %18 = vector.extract_strided_slice %1 {offsets = [0, 18], sizes = [16, 307], strides = [1, 1]} : vector<16x360xf32> to vector<16x307xf32>
    %cst_13 = arith.constant dense<0.000000e+00> : vector<32x307xf32>
    %19 = tpu.matmul %17, %18, %cst_13 {dimension_numbers = #tpu.dot_dimension_numbers<[1], [0], [0], [1], [0, 0, 1, 1], [], []>} : vector<32x16xf32>, vector<16x307xf32>, vector<32x307xf32> -> vector<32x307xf32>
    %20 = arith.addf %15, %19 : vector<32x307xf32>
    %c4 = arith.constant 4 : index
    %c0_14 = arith.constant 0 : index
    %c0_15 = arith.constant 0 : index
    %21 = vector.load %arg2[%c4, %c0_14, %c0_15] : memref<9x32x16xf32, #tpu.memory_space<vmem>>, vector<1x32x16xf32>
    %22 = vector.shape_cast %21 : vector<1x32x16xf32> to vector<32x16xf32>
    %23 = vector.extract_strided_slice %1 {offsets = [0, 19], sizes = [16, 307], strides = [1, 1]} : vector<16x360xf32> to vector<16x307xf32>
    %cst_16 = arith.constant dense<0.000000e+00> : vector<32x307xf32>
    %24 = tpu.matmul %22, %23, %cst_16 {dimension_numbers = #tpu.dot_dimension_numbers<[1], [0], [0], [1], [0, 0, 1, 1], [], []>} : vector<32x16xf32>, vector<16x307xf32>, vector<32x307xf32> -> vector<32x307xf32>
    %25 = arith.addf %20, %24 : vector<32x307xf32>
    %c5 = arith.constant 5 : index
    %c0_17 = arith.constant 0 : index
    %c0_18 = arith.constant 0 : index
    %26 = vector.load %arg2[%c5, %c0_17, %c0_18] : memref<9x32x16xf32, #tpu.memory_space<vmem>>, vector<1x32x16xf32>
    %27 = vector.shape_cast %26 : vector<1x32x16xf32> to vector<32x16xf32>
    %28 = vector.extract_strided_slice %1 {offsets = [0, 20], sizes = [16, 307], strides = [1, 1]} : vector<16x360xf32> to vector<16x307xf32>
    %cst_19 = arith.constant dense<0.000000e+00> : vector<32x307xf32>
    %29 = tpu.matmul %27, %28, %cst_19 {dimension_numbers = #tpu.dot_dimension_numbers<[1], [0], [0], [1], [0, 0, 1, 1], [], []>} : vector<32x16xf32>, vector<16x307xf32>, vector<32x307xf32> -> vector<32x307xf32>
    %30 = arith.addf %25, %29 : vector<32x307xf32>
    %c6 = arith.constant 6 : index
    %c0_20 = arith.constant 0 : index
    %c0_21 = arith.constant 0 : index
    %31 = vector.load %arg2[%c6, %c0_20, %c0_21] : memref<9x32x16xf32, #tpu.memory_space<vmem>>, vector<1x32x16xf32>
    %32 = vector.shape_cast %31 : vector<1x32x16xf32> to vector<32x16xf32>
    %33 = vector.extract_strided_slice %1 {offsets = [0, 36], sizes = [16, 307], strides = [1, 1]} : vector<16x360xf32> to vector<16x307xf32>
    %cst_22 = arith.constant dense<0.000000e+00> : vector<32x307xf32>
    %34 = tpu.matmul %32, %33, %cst_22 {dimension_numbers = #tpu.dot_dimension_numbers<[1], [0], [0], [1], [0, 0, 1, 1], [], []>} : vector<32x16xf32>, vector<16x307xf32>, vector<32x307xf32> -> vector<32x307xf32>
    %35 = arith.addf %30, %34 : vector<32x307xf32>
    %c7 = arith.constant 7 : index
    %c0_23 = arith.constant 0 : index
    %c0_24 = arith.constant 0 : index
    %36 = vector.load %arg2[%c7, %c0_23, %c0_24] : memref<9x32x16xf32, #tpu.memory_space<vmem>>, vector<1x32x16xf32>
    %37 = vector.shape_cast %36 : vector<1x32x16xf32> to vector<32x16xf32>
    %38 = vector.extract_strided_slice %1 {offsets = [0, 37], sizes = [16, 307], strides = [1, 1]} : vector<16x360xf32> to vector<16x307xf32>
    %cst_25 = arith.constant dense<0.000000e+00> : vector<32x307xf32>
    %39 = tpu.matmul %37, %38, %cst_25 {dimension_numbers = #tpu.dot_dimension_numbers<[1], [0], [0], [1], [0, 0, 1, 1], [], []>} : vector<32x16xf32>, vector<16x307xf32>, vector<32x307xf32> -> vector<32x307xf32>
    %40 = arith.addf %35, %39 : vector<32x307xf32>
    %c8 = arith.constant 8 : index
    %c0_26 = arith.constant 0 : index
    %c0_27 = arith.constant 0 : index
    %41 = vector.load %arg2[%c8, %c0_26, %c0_27] : memref<9x32x16xf32, #tpu.memory_space<vmem>>, vector<1x32x16xf32>
    %42 = vector.shape_cast %41 : vector<1x32x16xf32> to vector<32x16xf32>
    %43 = vector.extract_strided_slice %1 {offsets = [0, 38], sizes = [16, 307], strides = [1, 1]} : vector<16x360xf32> to vector<16x307xf32>
    %cst_28 = arith.constant dense<0.000000e+00> : vector<32x307xf32>
    %44 = tpu.matmul %42, %43, %cst_28 {dimension_numbers = #tpu.dot_dimension_numbers<[1], [0], [0], [1], [0, 0, 1, 1], [], []>} : vector<32x16xf32>, vector<16x307xf32>, vector<32x307xf32> -> vector<32x307xf32>
    %45 = arith.addf %40, %44 : vector<32x307xf32>
    %c0_29 = arith.constant 0 : index
    %c0_30 = arith.constant 0 : index
    %46 = vector.load %arg3[%c0_29, %c0_30] : memref<32x1xf32, #tpu.memory_space<vmem>>, vector<32x1xf32>
    %47 = vector.broadcast %46 : vector<32x1xf32> to vector<32x307xf32>
    %48 = arith.addf %45, %47 : vector<32x307xf32>
    %49 = vector.extract_strided_slice %48 {offsets = [0, 0], sizes = [32, 288], strides = [1, 1]} : vector<32x307xf32> to vector<32x288xf32>
    %50 = vector.extract_strided_slice %48 {offsets = [0, 1], sizes = [32, 288], strides = [1, 1]} : vector<32x307xf32> to vector<32x288xf32>
    %51 = arith.maximumf %49, %50 : vector<32x288xf32>
    %52 = vector.extract_strided_slice %48 {offsets = [0, 18], sizes = [32, 288], strides = [1, 1]} : vector<32x307xf32> to vector<32x288xf32>
    %53 = vector.extract_strided_slice %48 {offsets = [0, 19], sizes = [32, 288], strides = [1, 1]} : vector<32x307xf32> to vector<32x288xf32>
    %54 = arith.maximumf %52, %53 : vector<32x288xf32>
    %55 = arith.maximumf %51, %54 : vector<32x288xf32>
    %cst_31 = arith.constant 0.000000e+00 : f32
    %56 = vector.broadcast %cst_31 : f32 to vector<32x288xf32>
    %57 = arith.cmpf oge, %55, %56 : vector<32x288xf32>
    %cst_32 = arith.constant 2.000000e-01 : f32
    %58 = vector.broadcast %cst_32 : f32 to vector<32x288xf32>
    %59 = arith.mulf %58, %55 : vector<32x288xf32>
    %60 = arith.select %57, %55, %59 : vector<32x288xi1>, vector<32x288xf32>
    %c0_33 = arith.constant 0 : index
    %c0_34 = arith.constant 0 : index
    %61 = vector.load %arg4[%c0_33, %c0_34] : memref<32x1xf32, #tpu.memory_space<vmem>>, vector<32x1xf32>
    %62 = vector.broadcast %61 : vector<32x1xf32> to vector<32x288xf32>
    %63 = arith.mulf %60, %62 : vector<32x288xf32>
    %c0_35 = arith.constant 0 : index
    %c0_36 = arith.constant 0 : index
    %64 = vector.load %arg5[%c0_35, %c0_36] : memref<32x1xf32, #tpu.memory_space<vmem>>, vector<32x1xf32>
    %65 = vector.broadcast %64 : vector<32x1xf32> to vector<32x288xf32>
    %66 = arith.addf %63, %65 : vector<32x288xf32>
    %c0_37 = arith.constant 0 : index
    %c0_38 = arith.constant 0 : index
    %c0_39 = arith.constant 0 : index
    %67 = vector.load %arg6[%c0_37, %c0_38, %c0_39] : memref<1x32x288xf32, #tpu.memory_space<vmem>>, vector<1x32x288xf32>
    %68 = vector.shape_cast %67 : vector<1x32x288xf32> to vector<32x288xf32>
    %69 = vector.shape_cast %66 : vector<32x288xf32> to vector<1x32x288xf32>
    tpu.vector_store %arg6[%c0_37, %c0_38, %c0_39], %69 {strides = array<i32>} : memref<1x32x288xf32, #tpu.memory_space<vmem>>, vector<1x32x288xf32>,
    return
  }
  func.func @transform_0(%arg0: i32) -> (i32, i32, i32) {
    %c0_i32 = arith.constant 0 : i32
    %c0_i32_0 = arith.constant 0 : i32
    %c0_i32_1 = arith.constant 0 : i32
    return %arg0, %c0_i32, %c0_i32_0 : i32, i32, i32
  }
  func.func @transform_1(%arg0: i32) -> (i32, i32, i32) {
    %c0_i32 = arith.constant 0 : i32
    %c0_i32_0 = arith.constant 0 : i32
    %c0_i32_1 = arith.constant 0 : i32
    %c0_i32_2 = arith.constant 0 : i32
    return %c0_i32, %c0_i32_0, %c0_i32_1 : i32, i32, i32
  }
  func.func @transform_2(%arg0: i32) -> (i32, i32) {
    %c0_i32 = arith.constant 0 : i32
    %c0_i32_0 = arith.constant 0 : i32
    %c0_i32_1 = arith.constant 0 : i32
    return %c0_i32, %c0_i32_0 : i32, i32
  }
  func.func @transform_3(%arg0: i32) -> (i32, i32) {
    %c0_i32 = arith.constant 0 : i32
    %c0_i32_0 = arith.constant 0 : i32
    %c0_i32_1 = arith.constant 0 : i32
    return %c0_i32, %c0_i32_0 : i32, i32
  }
  func.func @transform_4(%arg0: i32) -> (i32, i32) {
    %c0_i32 = arith.constant 0 : i32
    %c0_i32_0 = arith.constant 0 : i32
    %c0_i32_1 = arith.constant 0 : i32
    return %c0_i32, %c0_i32_0 : i32, i32
  }
  func.func @transform_5(%arg0: i32) -> (i32, i32, i32) {
    %c0_i32 = arith.constant 0 : i32
    %c0_i32_0 = arith.constant 0 : i32
    %c0_i32_1 = arith.constant 0 : i32
    return %arg0, %c0_i32, %c0_i32_0 : i32, i32, i32
  }
}

</mosaic_0001>

<llo_original>
// kernel: disc_conv_forward.2
$region0: #{disc_conv_forward.2}
  #allocation0 [shape = 'u32[]', space=smem, size = 0x4, offset = 0x4, fixed_abs, tag = 'smem constant byte address 0x4 - core index']
  #allocation1 [shape = 'u32[144,128]{1,0:T(1,128)}', space=vmem, size = 0x12000, scoped, tag = 'internal scratch']
  %s0 = inlined_call_operand.vmem [shape: f32[2,3,256], index: 0, kind: input, shape index: {}]
  %s1 = inlined_call_operand.vmem [shape: f32[16,3], index: 1, kind: input, shape index: {}]
  %s2 = inlined_call_operand.vmem [shape: f32[16,1], index: 2, kind: input, shape index: {}]
  %s3 = inlined_call_operand.vmem [shape: f32[2,16,256], index: 3, kind: output, shape index: {}]
  %s4 = sld [smem:[#allocation0]]
  $region45: #{disc_conv_forward.2} parent=0
    _
  %s6 = ssub.s32 1, %s4
  %s7 = scalar_select 0, %s6, %s4
  loop: start=0, step=1, limit=4
  $region2: #{disc_conv_forward.2} parent=0 // loop_pre_header
    _
  $region3: #{disc_conv_forward.2} parent=0 // loop_header
    %s9 = sphi 0, %s13
    %p10 = scmp.ge.s32.totalorder %s9, 4
    %s16 = sphi 0, %s28
    %s17 = sphi 0, %s24
    %s18 = sphi 0, %s16
    %s19 = sphi 0, %s17
    %s20 = sphi 0, %s18
    %s21 = sphi 0, %s19
    %s33 = sphi 0, %s35
    %s36 = sphi 0, %s33
    %s37 = sphi 0, %s36
    %s53 = sphi 0, %s37
    %s57 = sphi 0, %s57
    %s59 = sphi 0, %s57
    %s60 = sphi 0, %s59
    %s74 = sphi 0, %s60
    %s78 = sphi 0, %s78
    %s80 = sphi 0, %s78
    %s81 = sphi 0, %s80
    %s95 = sphi 0, %s81
    %s103 = sphi 0, %s105
    %s106 = sphi 0, %s103
    %s107 = sphi 0, %s106
    %s123 = sphi 0, %s107
  $region4: #{disc_conv_forward.2} parent=0 // loop_header_branch
    %12 = sbr.rel (%p10) target = $region8
  $region5: #{disc_conv_forward.2} parent=0 // loop_body
    %s14 = ssub.s32 %s9, 1
    %s15 = ssub.s32 %s9, 2
    %s22 = sadd.s32 1, %s17
    %p23 = scmp.ge.s32.totalorder %s22, 1
    %s24 = scalar_select %p23, 0, %s22
    %s25 = sadd.s32 1, %s16
    %s26 = scalar_select %p23, %s25, %s16
    %p27 = scmp.ge.s32.totalorder %s26, 2
    %s28 = scalar_select %p27, 0, %s26
    %s29 = ssub.s32 %s16, %s28
    %s30 = ssub.s32 %s17, %s24
    %s31 = sor.u32 %s29, %s30
    %p32 = scmp.eq.s32.totalorder %s31, 0
    %s34 = sadd.s32 %s33, 1
    %s35 = scalar_select %p32, %s33, %s34
    %p38 = pneg %p32
    %p39 = scmp.eq.s32.totalorder %s9, 1
    %p40 = por %p38, %p39
    %p41 = scmp.ne.s32.totalorder %s33, %s36
    %p42 = scmp.eq.s32.totalorder %s9, 0
    %p43 = por %p41, %p42
    %p44 = scmp.ne.s32.totalorder %s33, %s36
    %p45 = scmp.eq.s32.totalorder %s14, 1
    %p46 = por %p44, %p45
    %p47 = scmp.ne.s32.totalorder %s36, %s37
    %p48 = scmp.eq.s32.totalorder %s14, 0
    %p49 = por %p47, %p48
    %p50 = scmp.ne.s32.totalorder %s36, %s37
    %p51 = scmp.eq.s32.totalorder %s15, 1
    %p52 = por %p50, %p51
    %p54 = scmp.ne.s32.totalorder %s37, %s53
    %p55 = scmp.eq.s32.totalorder %s15, 0
    %p56 = por %p54, %p55
    %s58 = sadd.s32 %s57, 1
    %p61 = scmp.eq.s32.totalorder %s9, 1
    %p62 = scmp.ne.s32.totalorder %s57, %s59
    %p63 = scmp.eq.s32.totalorder %s9, 0
    %p64 = por %p62, %p63
    %p65 = scmp.ne.s32.totalorder %s57, %s59
    %p66 = scmp.eq.s32.totalorder %s14, 1
    %p67 = por %p65, %p66
    %p68 = scmp.ne.s32.totalorder %s59, %s60
    %p69 = scmp.eq.s32.totalorder %s14, 0
    %p70 = por %p68, %p69
    %p71 = scmp.ne.s32.totalorder %s59, %s60
    %p72 = scmp.eq.s32.totalorder %s15, 1
    %p73 = por %p71, %p72
    %p75 = scmp.ne.s32.totalorder %s60, %s74
    %p76 = scmp.eq.s32.totalorder %s15, 0
    %p77 = por %p75, %p76
    %s79 = sadd.s32 %s78, 1
    %p82 = scmp.eq.s32.totalorder %s9, 1
    %p83 = scmp.ne.s32.totalorder %s78, %s80
    %p84 = scmp.eq.s32.totalorder %s9, 0
    %p85 = por %p83, %p84
    %p86 = scmp.ne.s32.totalorder %s78, %s80
    %p87 = scmp.eq.s32.totalorder %s14, 1
    %p88 = por %p86, %p87
    %p89 = scmp.ne.s32.totalorder %s80, %s81
    %p90 = scmp.eq.s32.totalorder %s14, 0
    %p91 = por %p89, %p90
    %p92 = scmp.ne.s32.totalorder %s80, %s81
    %p93 = scmp.eq.s32.totalorder %s15, 1
    %p94 = por %p92, %p93
    %p96 = scmp.ne.s32.totalorder %s81, %s95
    %p97 = scmp.eq.s32.totalorder %s15, 0
    %p98 = por %p96, %p97
    %s99 = ssub.s32 %s16, %s28
    %s100 = ssub.s32 %s17, %s24
    %s101 = sor.u32 %s99, %s100
    %p102 = scmp.eq.s32.totalorder %s101, 0
    %s104 = sadd.s32 %s103, 1
    %s105 = scalar_select %p102, %s103, %s104
    %p108 = pneg %p102
    %p109 = scmp.eq.s32.totalorder %s9, 1
    %p110 = por %p108, %p109
    %p111 = scmp.ne.s32.totalorder %s103, %s106
    %p112 = scmp.eq.s32.totalorder %s9, 0
    %p113 = por %p111, %p112
    %p114 = scmp.ne.s32.totalorder %s103, %s106
    %p115 = scmp.eq.s32.totalorder %s14, 1
    %p116 = por %p114, %p115
    %p117 = scmp.ne.s32.totalorder %s106, %s107
    %p118 = scmp.eq.s32.totalorder %s14, 0
    %p119 = por %p117, %p118
    %p120 = scmp.ne.s32.totalorder %s106, %s107
    %p121 = scmp.eq.s32.totalorder %s15, 1
    %p122 = por %p120, %p121
    %p124 = scmp.ne.s32.totalorder %s107, %s123
    %p125 = scmp.eq.s32.totalorder %s15, 0
    %p126 = por %p124, %p125
    %p127 = scmp.le.s32.totalorder 1, %s9
    %p128 = scmp.lt.s32.totalorder %s9, 3
    %p129 = pnand %p127, %p128
    %p130 = pneg %p129
    // Predicated region
    $region9: #{disc_conv_forward.2} parent=5 // pred_check
      _
    $region10: #{disc_conv_forward.2} parent=5 // pred_check_branch
      %132 = sbr.rel (%p129) target = $region12
    $region11: #{disc_conv_forward.2} parent=5 // pred_region
      %s133 = ssub.s32 %s9, 1
      // Predicated region
      $region13: #{disc_conv_forward.2} parent=11 // pred_check
        %p134 = pneg %p70
      $region14: #{disc_conv_forward.2} parent=11 // pred_check_branch
        %136 = sbr.rel (%p134) target = $region16
      $region15: #{disc_conv_forward.2} parent=11 // pred_region
        _
      $region16: #{disc_conv_forward.2} parent=11 // pred_fallthru
        _
      // Predicated region
      $region17: #{disc_conv_forward.2} parent=11 // pred_check
        %p137 = pneg %p91
      $region18: #{disc_conv_forward.2} parent=11 // pred_check_branch
        %139 = sbr.rel (%p137) target = $region20
      $region19: #{disc_conv_forward.2} parent=11 // pred_region
        _
      $region20: #{disc_conv_forward.2} parent=11 // pred_fallthru
        _
    $region12: #{disc_conv_forward.2} parent=5 // pred_fallthru
      _
    %p140 = scmp.lt.s32.totalorder %s9, 2
    // Predicated region
    $region21: #{disc_conv_forward.2} parent=5 // pred_check
      %p141 = pneg %p140
    $region22: #{disc_conv_forward.2} parent=5 // pred_check_branch
      %143 = sbr.rel (%p141) target = $region24
    $region23: #{disc_conv_forward.2} parent=5 // pred_region
      // Predicated region
      $region25: #{disc_conv_forward.2} parent=23 // pred_check
        %p144 = pneg %p43
      $region26: #{disc_conv_forward.2} parent=23 // pred_check_branch
        %146 = sbr.rel (%p144) target = $region28
      $region27: #{disc_conv_forward.2} parent=23 // pred_region
        %s147 = smul.u32 2, %s17
        %p148 = scmp.lt.s32.totalorder %s16, 1
        %s149 = scalar_select %p148, %s16, 1
        %p150 = scmp.lt.s32.totalorder %s147, 1
        %s151 = scalar_select %p150, %s147, 1
        %s152 = smul.addr %s149, 2
        %s153 = sadd.s32 %s151, %s152
        %s154 = smul.addr %s153, 4
        %s155 = scalar_lea.vmem %s0, %s154
        %s156 = smul.u32 2, %s17
      $region28: #{disc_conv_forward.2} parent=23 // pred_fallthru
        _
    $region24: #{disc_conv_forward.2} parent=5 // pred_fallthru
      _
    %p157 = scmp.le.s32.totalorder 1, %s9
    %p158 = scmp.lt.s32.totalorder %s9, 3
    %p159 = pnand %p157, %p158
    %p160 = pneg %p159
    // Predicated region
    $region29: #{disc_conv_forward.2} parent=5 // pred_check
      _
    $region30: #{disc_conv_forward.2} parent=5 // pred_check_branch
      %162 = sbr.rel (%p159) target = $region32
    $region31: #{disc_conv_forward.2} parent=5 // pred_region
      %s163 = ssub.s32 %s9, 1
      %s164 = smul.u32 2, %s19
      %p165 = scmp.lt.s32.totalorder %s18, 1
      %s166 = scalar_select %p165, %s18, 1
      %p167 = scmp.lt.s32.totalorder %s164, 1
      %s168 = scalar_select %p167, %s164, 1
      %s169 = smul.addr %s166, 2
      %s170 = sadd.s32 %s168, %s169
      %s171 = smul.addr %s170, 4
      %s172 = scalar_lea.vmem %s0, %s171
      %p173 = pneg %p49
      %p174 = pneg %p46
      %p175 = pneg %p70
      %p176 = pneg %p67
      %p177 = pneg %p91
      %p178 = pneg %p88
      %p179 = pneg %p119
      %p180 = pneg %p116
      %s181 = smul.u32 2, %s19
      %p182 = scmp.lt.s32.totalorder %s18, 1
      %s183 = scalar_select %p182, %s18, 1
      %p184 = scmp.lt.s32.totalorder %s181, 1
      %s185 = scalar_select %p184, %s181, 1
      %s186 = smul.addr %s183, 4
      %s187 = sadd.s32 %s185, %s186
      %s188 = smul.addr %s187, 8
      %s189 = scalar_lea.vmem %s3, %s188
      %s190 = smul.u32 2, %s19
      %p191 = scmp.lt.s32.totalorder %s18, 1
      %s192 = scalar_select %p191, %s18, 1
      %p193 = scmp.lt.s32.totalorder %s190, 1
      %s194 = scalar_select %p193, %s190, 1
      %s195 = smul.addr %s192, 2
      %s196 = sadd.s32 %s194, %s195
      %s197 = smul.addr %s196, 4
      %s198 = scalar_lea.vmem %s0, %s197
      %s199 = smul.u32 2, %s19
      %s200 = smul.u32 2, %s19
      %p201 = scmp.lt.s32.totalorder %s18, 1
      %s202 = scalar_select %p201, %s18, 1
      %p203 = scmp.lt.s32.totalorder %s200, 1
      %s204 = scalar_select %p203, %s200, 1
      %s205 = smul.addr %s202, 4
      %s206 = sadd.s32 %s204, %s205
      %s207 = smul.addr %s206, 8
      %s208 = scalar_lea.vmem %s3, %s207
      %s209 = smul.u32 2, %s19
      %v210 = vld [vmem:[%s1] sm:$0xff]
      %v211 = vld [vmem:[%s1 + $0x8] sm:$0xff]
      %v212 = vld [vmem:[%s198] sm:$0x77]
      %v213 = vld [vmem:[%s2] sm:$0xff]
      %v214 = vld [vmem:[%s2 + $0x8] sm:$0xff]
      %216 = vset.pattern.permute.xlu0 0
      %217 = vperm.xlu0 %216, %v213
      %v218 = vpop.permute.xlu0 %217
      %221 = vset.pattern.permute.xlu0 0
      %222 = vperm.xlu0 %221, %v214
      %v223 = vpop.permute.xlu0 %222
      %v226 = vcombine.high %v212, %v212
      %vm227 = vcmask 23552
      %v229 = vsel %vm227, %v210, 0
      %v232 = vsel %vm227, %v211, 0
      %vm234 = vcmask 1042432
      %v235 = vsel %vm234, %v212, 0
      %v237 = vsel %vm234, %v226, 0
      %239 = vmatprep.subr.mxu0 %v237
      %240 = vmatpush1.msra.mxu0 %v235
      %241 = vmatprep.subr.mxu0 0.0
      %242 = vmatpush1.msra.mxu0 0.0
      %243 = vmatprep.subr.mxu0 0.0
      %244 = vmatpush1.msra.mxu0 0.0
      %245 = vmatprep.subr.mxu0 0.0
      %246 = vmatpush1.msra.mxu0 0.0
      %247 = vmatprep.subr.mxu0 0.0
      %248 = vmatpush1.msra.mxu0 0.0
      %249 = vmatprep.subr.mxu0 0.0
      %250 = vmatpush1.msra.mxu0 0.0
      %251 = vmatprep.subr.mxu0 0.0
      %252 = vmatpush1.msra.mxu0 0.0
      %253 = vmatprep.subr.mxu0 0.0
      %254 = vmatpush1.msra.mxu0 0.0
      %255 = vmatprep.subr.mxu0 0.0
      %256 = vmatpush1.msra.mxu0 0.0
      %257 = vmatprep.subr.mxu0 0.0
      %258 = vmatpush1.msra.mxu0 0.0
      %259 = vmatprep.subr.mxu0 0.0
      %260 = vmatpush1.msra.mxu0 0.0
      %261 = vmatprep.subr.mxu0 0.0
      %262 = vmatpush1.msra.mxu0 0.0
      %263 = vmatprep.subr.mxu0 0.0
      %264 = vmatpush1.msra.mxu0 0.0
      %265 = vmatprep.subr.mxu0 0.0
      %266 = vmatpush1.msra.mxu0 0.0
      %267 = vmatprep.subr.mxu0 0.0
      %268 = vmatpush1.msra.mxu0 0.0
      %269 = vmatprep.subr.mxu0 0.0
      %270 = vmatpush1.msra.mxu0 0.0
      %271 = vmatprep.subr.mxu0 0.0
      %272 = vmatpush1.msra.mxu0 0.0
      %273 = vmatprep.subr.mxu0 0.0
      %274 = vmatpush1.msra.mxu0 0.0
      %275 = vmatprep.subr.mxu0 0.0
      %276 = vmatpush1.msra.mxu0 0.0
      %277 = vmatprep.subr.mxu0 0.0
      %278 = vmatpush1.msra.mxu0 0.0
      %279 = vmatprep.subr.mxu0 0.0
      %280 = vmatpush1.msra.mxu0 0.0
      %281 = vmatprep.subr.mxu0 0.0
      %282 = vmatpush1.msra.mxu0 0.0
      %283 = vmatprep.subr.mxu0 0.0
      %284 = vmatpush1.msra.mxu0 0.0
      %285 = vmatprep.subr.mxu0 0.0
      %286 = vmatpush1.msra.mxu0 0.0
      %287 = vmatprep.subr.mxu0 0.0
      %288 = vmatpush1.msra.mxu0 0.0
      %289 = vmatprep.subr.mxu0 0.0
      %290 = vmatpush1.msra.mxu0 0.0
      %291 = vmatprep.subr.mxu0 0.0
      %292 = vmatpush1.msra.mxu0 0.0
      %293 = vmatprep.subr.mxu0 0.0
      %294 = vmatpush1.msra.mxu0 0.0
      %295 = vmatprep.subr.mxu0 0.0
      %296 = vmatpush1.msra.mxu0 0.0
      %297 = vmatprep.subr.mxu0 0.0
      %298 = vmatpush1.msra.mxu0 0.0
      %299 = vmatprep.subr.mxu0 0.0
      %300 = vmatpush1.msra.mxu0 0.0
      %301 = vmatprep.subr.mxu0 0.0
      %302 = vmatpush1.msra.mxu0 0.0
      %303 = vmatprep.mubr.f32.mxu0 0.0
      %304 = vmatmul.mubr.f32.gmra.mrb[0].mxu0 %v229
      %v305 = vpop.f32.mrb[0].mxu0
      %v306 = vadd.f32 %v218, %v305
      %v307 = vpop.f32.mrb[0].mxu0
      %v308 = vadd.f32 %v218, %v307
      %309 = vmatprep.mubr.f32.mxu0 0.0
      %310 = vmatmul.mubr.f32.gmra.mrb[0].mxu0 %v232
      %v311 = vpop.f32.mrb[0].mxu0
      %v312 = vadd.f32 %v223, %v311
      %v313 = vpop.f32.mrb[0].mxu0
      %v314 = vadd.f32 %v223, %v313
      %315 = vdwg.mxu0
      %316 = vst [vmem:[%s208] sm:$0xff] %v306
      %317 = vst [vmem:[%s208 + $0x8] sm:$0xff] %v308
      %318 = vst [vmem:[%s208 + $0x10] sm:$0xff] %v312
      %319 = vst [vmem:[%s208 + $0x18] sm:$0xff] %v314
      %s320 = smul.u32 2, %s19
      %p321 = scmp.lt.s32.totalorder %s18, 1
      %s322 = scalar_select %p321, %s18, 1
      %p323 = scmp.lt.s32.totalorder %s320, 1
      %s324 = scalar_select %p323, %s320, 1
      %s325 = smul.addr %s322, 4
      %s326 = sadd.s32 %s324, %s325
      %s327 = smul.addr %s326, 8
      %s328 = scalar_lea.vmem %s3, %s327
      // Predicated region
      $region33: #{disc_conv_forward.2} parent=31 // pred_check
        %p329 = pneg %p116
      $region34: #{disc_conv_forward.2} parent=31 // pred_check_branch
        %331 = sbr.rel (%p329) target = $region36
      $region35: #{disc_conv_forward.2} parent=31 // pred_region
        %s332 = smul.u32 2, %s19
      $region36: #{disc_conv_forward.2} parent=31 // pred_fallthru
        _
    $region32: #{disc_conv_forward.2} parent=5 // pred_fallthru
      _
    %p333 = scmp.le.s32.totalorder 2, %s9
    // Predicated region
    $region37: #{disc_conv_forward.2} parent=5 // pred_check
      %p334 = pneg %p333
    $region38: #{disc_conv_forward.2} parent=5 // pred_check_branch
      %336 = sbr.rel (%p334) target = $region40
    $region39: #{disc_conv_forward.2} parent=5 // pred_region
      %s337 = ssub.s32 %s9, 2
      // Predicated region
      $region41: #{disc_conv_forward.2} parent=39 // pred_check
        %p338 = pneg %p122
      $region42: #{disc_conv_forward.2} parent=39 // pred_check_branch
        %340 = sbr.rel (%p338) target = $region44
      $region43: #{disc_conv_forward.2} parent=39 // pred_region
        %s341 = smul.u32 2, %s21
        %p342 = scmp.lt.s32.totalorder %s20, 1
        %s343 = scalar_select %p342, %s20, 1
        %p344 = scmp.lt.s32.totalorder %s341, 1
        %s345 = scalar_select %p344, %s341, 1
        %s346 = smul.addr %s343, 4
        %s347 = sadd.s32 %s345, %s346
        %s348 = smul.addr %s347, 8
        %s349 = scalar_lea.vmem %s3, %s348
      $region44: #{disc_conv_forward.2} parent=39 // pred_fallthru
        _
    $region40: #{disc_conv_forward.2} parent=5 // pred_fallthru
      _
  $region6: #{disc_conv_forward.2} parent=0 // loop_footer
    %s13 = sadd.s32 1, %s9
  $region7: #{disc_conv_forward.2} parent=0 // loop_footer_branch
    %8 = sbr.rel target = $region3
  $region8: #{disc_conv_forward.2} parent=0 // loop_exit
    _

// kernel: disc_conv_forward.3
$region0: #{disc_conv_forward.3}
  #allocation0 [shape = 'u32[]', space=smem, size = 0x4, offset = 0x4, fixed_abs, tag = 'smem constant byte address 0x4 - core index']
  #allocation1 [shape = 'u32[144,128]{1,0:T(1,128)}', space=vmem, size = 0x12000, scoped, tag = 'internal scratch']
  %s0 = inlined_call_operand.vmem [shape: f32[2,16,360], index: 0, kind: input, shape index: {}]
  %s1 = inlined_call_operand.vmem [shape: f32[9,32,16], index: 1, kind: input, shape index: {}]
  %s2 = inlined_call_operand.vmem [shape: f32[32,1], index: 2, kind: input, shape index: {}]
  %s3 = inlined_call_operand.vmem [shape: f32[32,1], index: 3, kind: input, shape index: {}]
  %s4 = inlined_call_operand.vmem [shape: f32[32,1], index: 4, kind: input, shape index: {}]
  %s5 = inlined_call_operand.vmem [shape: f32[2,32,288], index: 5, kind: output, shape index: {}]
  %s6 = sld [smem:[#allocation0]]
  $region53: #{disc_conv_forward.3} parent=0
    _
  %s8 = ssub.s32 1, %s6
  %s9 = scalar_select 0, %s8, %s6
  loop: start=0, step=1, limit=4
  $region2: #{disc_conv_forward.3} parent=0 // loop_pre_header
    _
  $region3: #{disc_conv_forward.3} parent=0 // loop_header
    %s11 = sphi 0, %s15
    %p12 = scmp.ge.s32.totalorder %s11, 4
    %s21 = sphi 0, %s23
    %s24 = sphi 0, %s21
    %s25 = sphi 0, %s24
    %s41 = sphi 0, %s25
    %s45 = sphi 0, %s45
    %s47 = sphi 0, %s45
    %s48 = sphi 0, %s47
    %s62 = sphi 0, %s48
    %s66 = sphi 0, %s66
    %s68 = sphi 0, %s66
    %s69 = sphi 0, %s68
    %s83 = sphi 0, %s69
    %s87 = sphi 0, %s87
    %s89 = sphi 0, %s87
    %s90 = sphi 0, %s89
    %s104 = sphi 0, %s90
    %s108 = sphi 0, %s108
    %s110 = sphi 0, %s108
    %s111 = sphi 0, %s110
    %s125 = sphi 0, %s111
    %s131 = sphi 0, %s133
    %s134 = sphi 0, %s131
    %s135 = sphi 0, %s134
    %s151 = sphi 0, %s135
  $region4: #{disc_conv_forward.3} parent=0 // loop_header_branch
    %14 = sbr.rel (%p12) target = $region8
  $region5: #{disc_conv_forward.3} parent=0 // loop_body
    %s16 = ssub.s32 %s11, 1
    %s17 = ssub.s32 %s11, 2
    %s18 = sadd.s32 %s11, 1
    %s19 = ssub.s32 %s11, %s18
    %p20 = scmp.eq.s32.totalorder %s19, 0
    %s22 = sadd.s32 %s21, 1
    %s23 = scalar_select %p20, %s21, %s22
    %p26 = pneg %p20
    %p27 = scmp.eq.s32.totalorder %s11, 1
    %p28 = por %p26, %p27
    %p29 = scmp.ne.s32.totalorder %s21, %s24
    %p30 = scmp.eq.s32.totalorder %s11, 0
    %p31 = por %p29, %p30
    %p32 = scmp.ne.s32.totalorder %s21, %s24
    %p33 = scmp.eq.s32.totalorder %s16, 1
    %p34 = por %p32, %p33
    %p35 = scmp.ne.s32.totalorder %s24, %s25
    %p36 = scmp.eq.s32.totalorder %s16, 0
    %p37 = por %p35, %p36
    %p38 = scmp.ne.s32.totalorder %s24, %s25
    %p39 = scmp.eq.s32.totalorder %s17, 1
    %p40 = por %p38, %p39
    %p42 = scmp.ne.s32.totalorder %s25, %s41
    %p43 = scmp.eq.s32.totalorder %s17, 0
    %p44 = por %p42, %p43
    %s46 = sadd.s32 %s45, 1
    %p49 = scmp.eq.s32.totalorder %s11, 1
    %p50 = scmp.ne.s32.totalorder %s45, %s47
    %p51 = scmp.eq.s32.totalorder %s11, 0
    %p52 = por %p50, %p51
    %p53 = scmp.ne.s32.totalorder %s45, %s47
    %p54 = scmp.eq.s32.totalorder %s16, 1
    %p55 = por %p53, %p54
    %p56 = scmp.ne.s32.totalorder %s47, %s48
    %p57 = scmp.eq.s32.totalorder %s16, 0
    %p58 = por %p56, %p57
    %p59 = scmp.ne.s32.totalorder %s47, %s48
    %p60 = scmp.eq.s32.totalorder %s17, 1
    %p61 = por %p59, %p60
    %p63 = scmp.ne.s32.totalorder %s48, %s62
    %p64 = scmp.eq.s32.totalorder %s17, 0
    %p65 = por %p63, %p64
    %s67 = sadd.s32 %s66, 1
    %p70 = scmp.eq.s32.totalorder %s11, 1
    %p71 = scmp.ne.s32.totalorder %s66, %s68
    %p72 = scmp.eq.s32.totalorder %s11, 0
    %p73 = por %p71, %p72
    %p74 = scmp.ne.s32.totalorder %s66, %s68
    %p75 = scmp.eq.s32.totalorder %s16, 1
    %p76 = por %p74, %p75
    %p77 = scmp.ne.s32.totalorder %s68, %s69
    %p78 = scmp.eq.s32.totalorder %s16, 0
    %p79 = por %p77, %p78
    %p80 = scmp.ne.s32.totalorder %s68, %s69
    %p81 = scmp.eq.s32.totalorder %s17, 1
    %p82 = por %p80, %p81
    %p84 = scmp.ne.s32.totalorder %s69, %s83
    %p85 = scmp.eq.s32.totalorder %s17, 0
    %p86 = por %p84, %p85
    %s88 = sadd.s32 %s87, 1
    %p91 = scmp.eq.s32.totalorder %s11, 1
    %p92 = scmp.ne.s32.totalorder %s87, %s89
    %p93 = scmp.eq.s32.totalorder %s11, 0
    %p94 = por %p92, %p93
    %p95 = scmp.ne.s32.totalorder %s87, %s89
    %p96 = scmp.eq.s32.totalorder %s16, 1
    %p97 = por %p95, %p96
    %p98 = scmp.ne.s32.totalorder %s89, %s90
    %p99 = scmp.eq.s32.totalorder %s16, 0
    %p100 = por %p98, %p99
    %p101 = scmp.ne.s32.totalorder %s89, %s90
    %p102 = scmp.eq.s32.totalorder %s17, 1
    %p103 = por %p101, %p102
    %p105 = scmp.ne.s32.totalorder %s90, %s104
    %p106 = scmp.eq.s32.totalorder %s17, 0
    %p107 = por %p105, %p106
    %s109 = sadd.s32 %s108, 1
    %p112 = scmp.eq.s32.totalorder %s11, 1
    %p113 = scmp.ne.s32.totalorder %s108, %s110
    %p114 = scmp.eq.s32.totalorder %s11, 0
    %p115 = por %p113, %p114
    %p116 = scmp.ne.s32.totalorder %s108, %s110
    %p117 = scmp.eq.s32.totalorder %s16, 1
    %p118 = por %p116, %p117
    %p119 = scmp.ne.s32.totalorder %s110, %s111
    %p120 = scmp.eq.s32.totalorder %s16, 0
    %p121 = por %p119, %p120
    %p122 = scmp.ne.s32.totalorder %s110, %s111
    %p123 = scmp.eq.s32.totalorder %s17, 1
    %p124 = por %p122, %p123
    %p126 = scmp.ne.s32.totalorder %s111, %s125
    %p127 = scmp.eq.s32.totalorder %s17, 0
    %p128 = por %p126, %p127
    %s129 = ssub.s32 %s11, %s18
    %p130 = scmp.eq.s32.totalorder %s129, 0
    %s132 = sadd.s32 %s131, 1
    %s133 = scalar_select %p130, %s131, %s132
    %p136 = pneg %p130
    %p137 = scmp.eq.s32.totalorder %s11, 1
    %p138 = por %p136, %p137
    %p139 = scmp.ne.s32.totalorder %s131, %s134
    %p140 = scmp.eq.s32.totalorder %s11, 0
    %p141 = por %p139, %p140
    %p142 = scmp.ne.s32.totalorder %s131, %s134
    %p143 = scmp.eq.s32.totalorder %s16, 1
    %p144 = por %p142, %p143
    %p145 = scmp.ne.s32.totalorder %s134, %s135
    %p146 = scmp.eq.s32.totalorder %s16, 0
    %p147 = por %p145, %p146
    %p148 = scmp.ne.s32.totalorder %s134, %s135
    %p149 = scmp.eq.s32.totalorder %s17, 1
    %p150 = por %p148, %p149
    %p152 = scmp.ne.s32.totalorder %s135, %s151
    %p153 = scmp.eq.s32.totalorder %s17, 0
    %p154 = por %p152, %p153
    %p155 = scmp.le.s32.totalorder 1, %s11
    %p156 = scmp.lt.s32.totalorder %s11, 3
    %p157 = pnand %p155, %p156
    %p158 = pneg %p157
    // Predicated region
    $region9: #{disc_conv_forward.3} parent=5 // pred_check
      _
    $region10: #{disc_conv_forward.3} parent=5 // pred_check_branch
      %160 = sbr.rel (%p157) target = $region12
    $region11: #{disc_conv_forward.3} parent=5 // pred_region
      %s161 = ssub.s32 %s11, 1
      // Predicated region
      $region13: #{disc_conv_forward.3} parent=11 // pred_check
        %p162 = pneg %p58
      $region14: #{disc_conv_forward.3} parent=11 // pred_check_branch
        %164 = sbr.rel (%p162) target = $region16
      $region15: #{disc_conv_forward.3} parent=11 // pred_region
        _
      $region16: #{disc_conv_forward.3} parent=11 // pred_fallthru
        _
      // Predicated region
      $region17: #{disc_conv_forward.3} parent=11 // pred_check
        %p165 = pneg %p79
      $region18: #{disc_conv_forward.3} parent=11 // pred_check_branch
        %167 = sbr.rel (%p165) target = $region20
      $region19: #{disc_conv_forward.3} parent=11 // pred_region
        _
      $region20: #{disc_conv_forward.3} parent=11 // pred_fallthru
        _
      // Predicated region
      $region21: #{disc_conv_forward.3} parent=11 // pred_check
        %p168 = pneg %p100
      $region22: #{disc_conv_forward.3} parent=11 // pred_check_branch
        %170 = sbr.rel (%p168) target = $region24
      $region23: #{disc_conv_forward.3} parent=11 // pred_region
        _
      $region24: #{disc_conv_forward.3} parent=11 // pred_fallthru
        _
      // Predicated region
      $region25: #{disc_conv_forward.3} parent=11 // pred_check
        %p171 = pneg %p121
      $region26: #{disc_conv_forward.3} parent=11 // pred_check_branch
        %173 = sbr.rel (%p171) target = $region28
      $region27: #{disc_conv_forward.3} parent=11 // pred_region
        _
      $region28: #{disc_conv_forward.3} parent=11 // pred_fallthru
        _
    $region12: #{disc_conv_forward.3} parent=5 // pred_fallthru
      _
    %p174 = scmp.lt.s32.totalorder %s11, 2
    // Predicated region
    $region29: #{disc_conv_forward.3} parent=5 // pred_check
      %p175 = pneg %p174
    $region30: #{disc_conv_forward.3} parent=5 // pred_check_branch
      %177 = sbr.rel (%p175) target = $region32
    $region31: #{disc_conv_forward.3} parent=5 // pred_region
      // Predicated region
      $region33: #{disc_conv_forward.3} parent=31 // pred_check
        %p178 = pneg %p31
      $region34: #{disc_conv_forward.3} parent=31 // pred_check_branch
        %180 = sbr.rel (%p178) target = $region36
      $region35: #{disc_conv_forward.3} parent=31 // pred_region
        %p181 = scmp.lt.s32.totalorder %s11, 1
        %s182 = scalar_select %p181, %s11, 1
        %s183 = smul.addr %s182, 6
        %s184 = smul.addr %s183, 8
        %s185 = scalar_lea.vmem %s0, %s184
      $region36: #{disc_conv_forward.3} parent=31 // pred_fallthru
        _
    $region32: #{disc_conv_forward.3} parent=5 // pred_fallthru
      _
    %p186 = scmp.le.s32.totalorder 1, %s11
    %p187 = scmp.lt.s32.totalorder %s11, 3
    %p188 = pnand %p186, %p187
    %p189 = pneg %p188
    // Predicated region
    $region37: #{disc_conv_forward.3} parent=5 // pred_check
      _
    $region38: #{disc_conv_forward.3} parent=5 // pred_check_branch
      %191 = sbr.rel (%p188) target = $region40
    $region39: #{disc_conv_forward.3} parent=5 // pred_region
      %s192 = ssub.s32 %s11, 1
      %p193 = scmp.lt.s32.totalorder %s16, 1
      %s194 = scalar_select %p193, %s16, 1
      %s195 = smul.addr %s194, 6
      %s196 = smul.addr %s195, 8
      %s197 = scalar_lea.vmem %s0, %s196
      %p198 = pneg %p37
      %p199 = pneg %p34
      %p200 = pneg %p58
      %p201 = pneg %p55
      %p202 = pneg %p79
      %p203 = pneg %p76
      %p204 = pneg %p100
      %p205 = pneg %p97
      %p206 = pneg %p121
      %p207 = pneg %p118
      %p208 = pneg %p147
      %p209 = pneg %p144
      %p210 = scmp.lt.s32.totalorder %s16, 1
      %s211 = scalar_select %p210, %s16, 1
      %s212 = smul.addr %s211, 12
      %s213 = smul.addr %s212, 8
      %s214 = scalar_lea.vmem %s5, %s213
      %p215 = scmp.lt.s32.totalorder %s16, 1
      %s216 = scalar_select %p215, %s16, 1
      %s217 = smul.addr %s216, 6
      %s218 = smul.addr %s217, 8
      %s219 = scalar_lea.vmem %s0, %s218
      %p220 = scmp.lt.s32.totalorder %s16, 1
      %s221 = scalar_select %p220, %s16, 1
      %s222 = smul.addr %s221, 12
      %s223 = smul.addr %s222, 8
      %s224 = scalar_lea.vmem %s5, %s223
      %v225 = vld [vmem:[%s219] sm:$0xff]
      %v226 = vld [vmem:[%s219 + $0x8] sm:$0xff]
      %v227 = vld [vmem:[%s219 + $0x10] sm:$0xff]
      %v228 = vld [vmem:[%s219 + $0x18] sm:$0xff]
      %v229 = vld [vmem:[%s219 + $0x20] sm:$0xff]
      %v230 = vld [vmem:[%s219 + $0x28] sm:$0xff]
      %v231 = vld [vmem:[%s1] sm:$0xff]
      %v232 = vld [vmem:[%s1 + $0x8] sm:$0xff]
      %v233 = vld [vmem:[%s1 + $0x10] sm:$0xff]
      %v234 = vld [vmem:[%s1 + $0x18] sm:$0xff]
      %s235 = scalar_lea.vmem %s1, 32
      %v236 = vld [vmem:[%s235] sm:$0xff]
      %v237 = vld [vmem:[%s235 + $0x8] sm:$0xff]
      %v238 = vld [vmem:[%s235 + $0x10] sm:$0xff]
      %v239 = vld [vmem:[%s235 + $0x18] sm:$0xff]
      %246 = vrot.lane.b32.xlu0 %v225, 127
      %v247 = vpop.permute.xlu0 %246
      %248 = vrot.lane.b32.xlu0 %v226, 127
      %v249 = vpop.permute.xlu0 %248
      %250 = vrot.lane.b32.xlu0 %v227, 127
      %v251 = vpop.permute.xlu0 %250
      %252 = vrot.lane.b32.xlu0 %v228, 127
      %v253 = vpop.permute.xlu0 %252
      %254 = vrot.lane.b32.xlu0 %v229, 127
      %v255 = vpop.permute.xlu0 %254
      %256 = vrot.lane.b32.xlu0 %v230, 127
      %v257 = vpop.permute.xlu0 %256
      %vm258 = vcmask 1039360
      %v259 = vsel %vm258, %v247, %v249
      %v260 = vsel %vm258, %v249, %v251
      %v261 = vsel %vm258, %v253, %v255
      %v262 = vsel %vm258, %v255, %v257
      %vm269 = vcmask 130048
      %v271 = vsel %vm269, %v236, 0
      %v274 = vsel %vm269, %v237, 0
      %v277 = vsel %vm269, %v238, 0
      %v280 = vsel %vm269, %v239, 0
      %282 = vmatprep.subr.mxu0 %v260
      %283 = vmatpush1.msra.mxu0 %v259
      %284 = vmatprep.subr.mxu0 %v262
      %285 = vmatpush1.msra.mxu0 %v261
      %286 = vmatprep.subr.mxu0 0.0
      %287 = vmatpush1.msra.mxu0 0.0
      %288 = vmatprep.subr.mxu0 0.0
      %289 = vmatpush1.msra.mxu0 0.0
      %290 = vmatprep.subr.mxu0 0.0
      %291 = vmatpush1.msra.mxu0 0.0
      %292 = vmatprep.subr.mxu0 0.0
      %293 = vmatpush1.msra.mxu0 0.0
      %294 = vmatprep.subr.mxu0 0.0
      %295 = vmatpush1.msra.mxu0 0.0
      %296 = vmatprep.subr.mxu0 0.0
      %297 = vmatpush1.msra.mxu0 0.0
      %298 = vmatprep.subr.mxu0 0.0
      %299 = vmatpush1.msra.mxu0 0.0
      %300 = vmatprep.subr.mxu0 0.0
      %301 = vmatpush1.msra.mxu0 0.0
      %302 = vmatprep.subr.mxu0 0.0
      %303 = vmatpush1.msra.mxu0 0.0
      %304 = vmatprep.subr.mxu0 0.0
      %305 = vmatpush1.msra.mxu0 0.0
      %306 = vmatprep.subr.mxu0 0.0
      %307 = vmatpush1.msra.mxu0 0.0
      %308 = vmatprep.subr.mxu0 0.0
      %309 = vmatpush1.msra.mxu0 0.0
      %310 = vmatprep.subr.mxu0 0.0
      %311 = vmatpush1.msra.mxu0 0.0
      %312 = vmatprep.subr.mxu0 0.0
      %313 = vmatpush1.msra.mxu0 0.0
      %314 = vmatprep.subr.mxu0 0.0
      %315 = vmatpush1.msra.mxu0 0.0
      %316 = vmatprep.subr.mxu0 0.0
      %317 = vmatpush1.msra.mxu0 0.0
      %318 = vmatprep.subr.mxu0 0.0
      %319 = vmatpush1.msra.mxu0 0.0
      %320 = vmatprep.subr.mxu0 0.0
      %321 = vmatpush1.msra.mxu0 0.0
      %322 = vmatprep.subr.mxu0 0.0
      %323 = vmatpush1.msra.mxu0 0.0
      %324 = vmatprep.subr.mxu0 0.0
      %325 = vmatpush1.msra.mxu0 0.0
      %326 = vmatprep.subr.mxu0 0.0
      %327 = vmatpush1.msra.mxu0 0.0
      %328 = vmatprep.subr.mxu0 0.0
      %329 = vmatpush1.msra.mxu0 0.0
      %330 = vmatprep.subr.mxu0 0.0
      %331 = vmatpush1.msra.mxu0 0.0
      %332 = vmatprep.subr.mxu0 0.0
      %333 = vmatpush1.msra.mxu0 0.0
      %334 = vmatprep.subr.mxu0 0.0
      %335 = vmatpush1.msra.mxu0 0.0
      %336 = vmatprep.subr.mxu0 0.0
      %337 = vmatpush1.msra.mxu0 0.0
      %338 = vmatprep.subr.mxu0 0.0
      %339 = vmatpush1.msra.mxu0 0.0
      %340 = vmatprep.subr.mxu0 0.0
      %341 = vmatpush1.msra.mxu0 0.0
      %342 = vmatprep.subr.mxu0 0.0
      %343 = vmatpush1.msra.mxu0 0.0
      %344 = vmatprep.subr.mxu0 0.0
      %345 = vmatpush1.msra.mxu0 0.0
      %346 = vmatprep.mubr.f32.mxu0 0.0
      %347 = vmatmul.mubr.f32.gmra.mrb[0].mxu0 %v271
      %v348 = vpop.f32.mrb[0].mxu0
      %v349 = vadd.f32 0.0, %v348
      %v350 = vpop.f32.mrb[0].mxu0
      %v351 = vadd.f32 0.0, %v350
      %352 = vmatprep.mubr.f32.mxu0 0.0
      %353 = vmatmul.mubr.f32.gmra.mrb[0].mxu0 %v274
      %v354 = vpop.f32.mrb[0].mxu0
      %v355 = vadd.f32 0.0, %v354
      %v356 = vpop.f32.mrb[0].mxu0
      %v357 = vadd.f32 0.0, %v356
      %358 = vmatprep.mubr.f32.mxu0 0.0
      %359 = vmatmul.mubr.f32.gmra.mrb[0].mxu0 %v277
      %v360 = vpop.f32.mrb[0].mxu0
      %v361 = vadd.f32 0.0, %v360
      %v362 = vpop.f32.mrb[0].mxu0
      %v363 = vadd.f32 0.0, %v362
      %364 = vmatprep.mubr.f32.mxu0 0.0
      %365 = vmatmul.mubr.f32.gmra.mrb[0].mxu0 %v280
      %v366 = vpop.f32.mrb[0].mxu0
      %v367 = vadd.f32 0.0, %v366
      %v368 = vpop.f32.mrb[0].mxu0
      %v369 = vadd.f32 0.0, %v368
      %370 = vdwg.mxu0
      %371 = vmatprep.subr.mxu0 0.0
      %372 = vmatpush1.msra.mxu0 %v251
      %373 = vmatprep.subr.mxu0 0.0
      %374 = vmatpush1.msra.mxu0 %v257
      %375 = vmatprep.subr.mxu0 0.0
      %376 = vmatpush1.msra.mxu0 0.0
      %377 = vmatprep.subr.mxu0 0.0
      %378 = vmatpush1.msra.mxu0 0.0
      %379 = vmatprep.subr.mxu0 0.0
      %380 = vmatpush1.msra.mxu0 0.0
      %381 = vmatprep.subr.mxu0 0.0
      %382 = vmatpush1.msra.mxu0 0.0
      %383 = vmatprep.subr.mxu0 0.0
      %384 = vmatpush1.msra.mxu0 0.0
      %385 = vmatprep.subr.mxu0 0.0
      %386 = vmatpush1.msra.mxu0 0.0
      %387 = vmatprep.subr.mxu0 0.0
      %388 = vmatpush1.msra.mxu0 0.0
      %389 = vmatprep.subr.mxu0 0.0
      %390 = vmatpush1.msra.mxu0 0.0
      %391 = vmatprep.subr.mxu0 0.0
      %392 = vmatpush1.msra.mxu0 0.0
      %393 = vmatprep.subr.mxu0 0.0
      %394 = vmatpush1.msra.mxu0 0.0
      %395 = vmatprep.subr.mxu0 0.0
      %396 = vmatpush1.msra.mxu0 0.0
      %397 = vmatprep.subr.mxu0 0.0
      %398 = vmatpush1.msra.mxu0 0.0
      %399 = vmatprep.subr.mxu0 0.0
      %400 = vmatpush1.msra.mxu0 0.0
      %401 = vmatprep.subr.mxu0 0.0
      %402 = vmatpush1.msra.mxu0 0.0
      %403 = vmatprep.subr.mxu0 0.0
      %404 = vmatpush1.msra.mxu0 0.0
      %405 = vmatprep.subr.mxu0 0.0
      %406 = vmatpush1.msra.mxu0 0.0
      %407 = vmatprep.subr.mxu0 0.0
      %408 = vmatpush1.msra.mxu0 0.0
      %409 = vmatprep.subr.mxu0 0.0
      %410 = vmatpush1.msra.mxu0 0.0
      %411 = vmatprep.subr.mxu0 0.0
      %412 = vmatpush1.msra.mxu0 0.0
      %413 = vmatprep.subr.mxu0 0.0
      %414 = vmatpush1.msra.mxu0 0.0
      %415 = vmatprep.subr.mxu0 0.0
      %416 = vmatpush1.msra.mxu0 0.0
      %417 = vmatprep.subr.mxu0 0.0
      %418 = vmatpush1.msra.mxu0 0.0
      %419 = vmatprep.subr.mxu0 0.0
      %420 = vmatpush1.msra.mxu0 0.0
      %421 = vmatprep.subr.mxu0 0.0
      %422 = vmatpush1.msra.mxu0 0.0
      %423 = vmatprep.subr.mxu0 0.0
      %424 = vmatpush1.msra.mxu0 0.0
      %425 = vmatprep.subr.mxu0 0.0
      %426 = vmatpush1.msra.mxu0 0.0
      %427 = vmatprep.subr.mxu0 0.0
      %428 = vmatpush1.msra.mxu0 0.0
      %429 = vmatprep.subr.mxu0 0.0
      %430 = vmatpush1.msra.mxu0 0.0
      %431 = vmatprep.subr.mxu0 0.0
      %432 = vmatpush1.msra.mxu0 0.0
      %433 = vmatprep.subr.mxu0 0.0
      %434 = vmatpush1.msra.mxu0 0.0
      %435 = vmatprep.mubr.f32.mxu0 0.0
      %436 = vmatmul.mubr.f32.gmra.mrb[0].mxu0 %v271
      %v437 = vpop.f32.mrb[0].mxu0
      %v438 = vadd.f32 0.0, %v437
      %v439 = vpop.f32.mrb[0].mxu0
      %440 = vmatprep.mubr.f32.mxu0 0.0
      %441 = vmatmul.mubr.f32.gmra.mrb[0].mxu0 %v274
      %v442 = vpop.f32.mrb[0].mxu0
      %v443 = vadd.f32 0.0, %v442
      %v444 = vpop.f32.mrb[0].mxu0
      %445 = vmatprep.mubr.f32.mxu0 0.0
      %446 = vmatmul.mubr.f32.gmra.mrb[0].mxu0 %v277
      %v447 = vpop.f32.mrb[0].mxu0
      %v448 = vadd.f32 0.0, %v447
      %v449 = vpop.f32.mrb[0].mxu0
      %450 = vmatprep.mubr.f32.mxu0 0.0
      %451 = vmatmul.mubr.f32.gmra.mrb[0].mxu0 %v280
      %v452 = vpop.f32.mrb[0].mxu0
      %v453 = vadd.f32 0.0, %v452
      %v454 = vpop.f32.mrb[0].mxu0
      %455 = vdwg.mxu0
      %v457 = vsel %vm269, %v231, 0
      %v460 = vsel %vm269, %v232, 0
      %v463 = vsel %vm269, %v233, 0
      %v466 = vsel %vm269, %v234, 0
      %468 = vmatprep.subr.mxu0 %v226
      %469 = vmatpush1.msra.mxu0 %v225
      %470 = vmatprep.subr.mxu0 %v229
      %471 = vmatpush1.msra.mxu0 %v228
      %472 = vmatprep.subr.mxu0 0.0
      %473 = vmatpush1.msra.mxu0 0.0
      %474 = vmatprep.subr.mxu0 0.0
      %475 = vmatpush1.msra.mxu0 0.0
      %476 = vmatprep.subr.mxu0 0.0
      %477 = vmatpush1.msra.mxu0 0.0
      %478 = vmatprep.subr.mxu0 0.0
      %479 = vmatpush1.msra.mxu0 0.0
      %480 = vmatprep.subr.mxu0 0.0
      %481 = vmatpush1.msra.mxu0 0.0
      %482 = vmatprep.subr.mxu0 0.0
      %483 = vmatpush1.msra.mxu0 0.0
      %484 = vmatprep.subr.mxu0 0.0
      %485 = vmatpush1.msra.mxu0 0.0
      %486 = vmatprep.subr.mxu0 0.0
      %487 = vmatpush1.msra.mxu0 0.0
      %488 = vmatprep.subr.mxu0 0.0
      %489 = vmatpush1.msra.mxu0 0.0
      %490 = vmatprep.subr.mxu0 0.0
      %491 = vmatpush1.msra.mxu0 0.0
      %492 = vmatprep.subr.mxu0 0.0
      %493 = vmatpush1.msra.mxu0 0.0
      %494 = vmatprep.subr.mxu0 0.0
      %495 = vmatpush1.msra.mxu0 0.0
      %496 = vmatprep.subr.mxu0 0.0
      %497 = vmatpush1.msra.mxu0 0.0
      %498 = vmatprep.subr.mxu0 0.0
      %499 = vmatpush1.msra.mxu0 0.0
      %500 = vmatprep.subr.mxu0 0.0
      %501 = vmatpush1.msra.mxu0 0.0
      %502 = vmatprep.subr.mxu0 0.0
      %503 = vmatpush1.msra.mxu0 0.0
      %504 = vmatprep.subr.mxu0 0.0
      %505 = vmatpush1.msra.mxu0 0.0
      %506 = vmatprep.subr.mxu0 0.0
      %507 = vmatpush1.msra.mxu0 0.0
      %508 = vmatprep.subr.mxu0 0.0
      %509 = vmatpush1.msra.mxu0 0.0
      %510 = vmatprep.subr.mxu0 0.0
      %511 = vmatpush1.msra.mxu0 0.0
      %512 = vmatprep.subr.mxu0 0.0
      %513 = vmatpush1.msra.mxu0 0.0
      %514 = vmatprep.subr.mxu0 0.0
      %515 = vmatpush1.msra.mxu0 0.0
      %516 = vmatprep.subr.mxu0 0.0
      %517 = vmatpush1.msra.mxu0 0.0
      %518 = vmatprep.subr.mxu0 0.0
      %519 = vmatpush1.msra.mxu0 0.0
      %520 = vmatprep.subr.mxu0 0.0
      %521 = vmatpush1.msra.mxu0 0.0
      %522 = vmatprep.subr.mxu0 0.0
      %523 = vmatpush1.msra.mxu0 0.0
      %524 = vmatprep.subr.mxu0 0.0
      %525 = vmatpush1.msra.mxu0 0.0
      %526 = vmatprep.subr.mxu0 0.0
      %527 = vmatpush1.msra.mxu0 0.0
      %528 = vmatprep.subr.mxu0 0.0
      %529 = vmatpush1.msra.mxu0 0.0
      %530 = vmatprep.subr.mxu0 0.0
      %531 = vmatpush1.msra.mxu0 0.0
      %532 = vmatprep.mubr.f32.mxu0 0.0
      %533 = vmatmul.mubr.f32.gmra.mrb[0].mxu0 %v457
      %v534 = vpop.f32.mrb[0].mxu0
      %v535 = vadd.f32 %v349, %v534
      %v536 = vpop.f32.mrb[0].mxu0
      %v537 = vadd.f32 %v351, %v536
      %538 = vmatprep.mubr.f32.mxu0 0.0
      %539 = vmatmul.mubr.f32.gmra.mrb[0].mxu0 %v460
      %v540 = vpop.f32.mrb[0].mxu0
      %v541 = vadd.f32 %v355, %v540
      %v542 = vpop.f32.mrb[0].mxu0
      %v543 = vadd.f32 %v357, %v542
      %544 = vmatprep.mubr.f32.mxu0 0.0
      %545 = vmatmul.mubr.f32.gmra.mrb[0].mxu0 %v463
      %v546 = vpop.f32.mrb[0].mxu0
      %v547 = vadd.f32 %v361, %v546
      %v548 = vpop.f32.mrb[0].mxu0
      %v549 = vadd.f32 %v363, %v548
      %550 = vmatprep.mubr.f32.mxu0 0.0
      %551 = vmatmul.mubr.f32.gmra.mrb[0].mxu0 %v466
      %v552 = vpop.f32.mrb[0].mxu0
      %v553 = vadd.f32 %v367, %v552
      %v554 = vpop.f32.mrb[0].mxu0
      %v555 = vadd.f32 %v369, %v554
      %556 = vdwg.mxu0
      %557 = vmatprep.subr.mxu0 0.0
      %558 = vmatpush1.msra.mxu0 %v227
      %559 = vmatprep.subr.mxu0 0.0
      %560 = vmatpush1.msra.mxu0 %v230
      %561 = vmatprep.subr.mxu0 0.0
      %562 = vmatpush1.msra.mxu0 0.0
      %563 = vmatprep.subr.mxu0 0.0
      %564 = vmatpush1.msra.mxu0 0.0
      %565 = vmatprep.subr.mxu0 0.0
      %566 = vmatpush1.msra.mxu0 0.0
      %567 = vmatprep.subr.mxu0 0.0
      %568 = vmatpush1.msra.mxu0 0.0
      %569 = vmatprep.subr.mxu0 0.0
      %570 = vmatpush1.msra.mxu0 0.0
      %571 = vmatprep.subr.mxu0 0.0
      %572 = vmatpush1.msra.mxu0 0.0
      %573 = vmatprep.subr.mxu0 0.0
      %574 = vmatpush1.msra.mxu0 0.0
      %575 = vmatprep.subr.mxu0 0.0
      %576 = vmatpush1.msra.mxu0 0.0
      %577 = vmatprep.subr.mxu0 0.0
      %578 = vmatpush1.msra.mxu0 0.0
      %579 = vmatprep.subr.mxu0 0.0
      %580 = vmatpush1.msra.mxu0 0.0
      %581 = vmatprep.subr.mxu0 0.0
      %582 = vmatpush1.msra.mxu0 0.0
      %583 = vmatprep.subr.mxu0 0.0
      %584 = vmatpush1.msra.mxu0 0.0
      %585 = vmatprep.subr.mxu0 0.0
      %586 = vmatpush1.msra.mxu0 0.0
      %587 = vmatprep.subr.mxu0 0.0
      %588 = vmatpush1.msra.mxu0 0.0
      %589 = vmatprep.subr.mxu0 0.0
      %590 = vmatpush1.msra.mxu0 0.0
      %591 = vmatprep.subr.mxu0 0.0
      %592 = vmatpush1.msra.mxu0 0.0
      %593 = vmatprep.subr.mxu0 0.0
      %594 = vmatpush1.msra.mxu0 0.0
      %595 = vmatprep.subr.mxu0 0.0
      %596 = vmatpush1.msra.mxu0 0.0
      %597 = vmatprep.subr.mxu0 0.0
      %598 = vmatpush1.msra.mxu0 0.0
      %599 = vmatprep.subr.mxu0 0.0
      %600 = vmatpush1.msra.mxu0 0.0
      %601 = vmatprep.subr.mxu0 0.0
      %602 = vmatpush1.msra.mxu0 0.0
      %603 = vmatprep.subr.mxu0 0.0
      %604 = vmatpush1.msra.mxu0 0.0
      %605 = vmatprep.subr.mxu0 0.0
      %606 = vmatpush1.msra.mxu0 0.0
      %607 = vmatprep.subr.mxu0 0.0
      %608 = vmatpush1.msra.mxu0 0.0
      %609 = vmatprep.subr.mxu0 0.0
      %610 = vmatpush1.msra.mxu0 0.0
      %611 = vmatprep.subr.mxu0 0.0
      %612 = vmatpush1.msra.mxu0 0.0
      %613 = vmatprep.subr.mxu0 0.0
      %614 = vmatpush1.msra.mxu0 0.0
      %615 = vmatprep.subr.mxu0 0.0
      %616 = vmatpush1.msra.mxu0 0.0
      %617 = vmatprep.subr.mxu0 0.0
      %618 = vmatpush1.msra.mxu0 0.0
      %619 = vmatprep.subr.mxu0 0.0
      %620 = vmatpush1.msra.mxu0 0.0
      %621 = vmatprep.mubr.f32.mxu0 0.0
      %622 = vmatmul.mubr.f32.gmra.mrb[0].mxu0 %v457
      %v623 = vpop.f32.mrb[0].mxu0
      %v624 = vadd.f32 %v438, %v623
      %v625 = vpop.f32.mrb[0].mxu0
      %626 = vmatprep.mubr.f32.mxu0 0.0
      %627 = vmatmul.mubr.f32.gmra.mrb[0].mxu0 %v460
      %v628 = vpop.f32.mrb[0].mxu0
      %v629 = vadd.f32 %v443, %v628
      %v630 = vpop.f32.mrb[0].mxu0
      %631 = vmatprep.mubr.f32.mxu0 0.0
      %632 = vmatmul.mubr.f32.gmra.mrb[0].mxu0 %v463
      %v633 = vpop.f32.mrb[0].mxu0
      %v634 = vadd.f32 %v448, %v633
      %v635 = vpop.f32.mrb[0].mxu0
      %636 = vmatprep.mubr.f32.mxu0 0.0
      %637 = vmatmul.mubr.f32.gmra.mrb[0].mxu0 %v466
      %v638 = vpop.f32.mrb[0].mxu0
      %v639 = vadd.f32 %v453, %v638
      %v640 = vpop.f32.mrb[0].mxu0
      %641 = vdwg.mxu0
      %s642 = scalar_lea.vmem %s1, 64
      %v643 = vld [vmem:[%s642] sm:$0xff]
      %v644 = vld [vmem:[%s642 + $0x8] sm:$0xff]
      %v645 = vld [vmem:[%s642 + $0x10] sm:$0xff]
      %v646 = vld [vmem:[%s642 + $0x18] sm:$0xff]
      %647 = vrot.lane.b32.xlu0 %v225, 126
      %v648 = vpop.permute.xlu0 %647
      %649 = vrot.lane.b32.xlu0 %v226, 126
      %v650 = vpop.permute.xlu0 %649
      %651 = vrot.lane.b32.xlu0 %v227, 126
      %v652 = vpop.permute.xlu0 %651
      %653 = vrot.lane.b32.xlu0 %v228, 126
      %v654 = vpop.permute.xlu0 %653
      %655 = vrot.lane.b32.xlu0 %v229, 126
      %v656 = vpop.permute.xlu0 %655
      %657 = vrot.lane.b32.xlu0 %v230, 126
      %v658 = vpop.permute.xlu0 %657
      %vm659 = vcmask 1031168
      %v660 = vsel %vm659, %v648, %v650
      %v661 = vsel %vm659, %v650, %v652
      %v662 = vsel %vm659, %v654, %v656
      %v663 = vsel %vm659, %v656, %v658
      %v671 = vsel %vm269, %v643, 0
      %v674 = vsel %vm269, %v644, 0
      %v677 = vsel %vm269, %v645, 0
      %v680 = vsel %vm269, %v646, 0
      %682 = vmatprep.subr.mxu0 %v661
      %683 = vmatpush1.msra.mxu0 %v660
      %684 = vmatprep.subr.mxu0 %v663
      %685 = vmatpush1.msra.mxu0 %v662
      %686 = vmatprep.subr.mxu0 0.0
      %687 = vmatpush1.msra.mxu0 0.0
      %688 = vmatprep.subr.mxu0 0.0
      %689 = vmatpush1.msra.mxu0 0.0
      %690 = vmatprep.subr.mxu0 0.0
      %691 = vmatpush1.msra.mxu0 0.0
      %692 = vmatprep.subr.mxu0 0.0
      %693 = vmatpush1.msra.mxu0 0.0
      %694 = vmatprep.subr.mxu0 0.0
      %695 = vmatpush1.msra.mxu0 0.0
      %696 = vmatprep.subr.mxu0 0.0
      %697 = vmatpush1.msra.mxu0 0.0
      %698 = vmatprep.subr.mxu0 0.0
      %699 = vmatpush1.msra.mxu0 0.0
      %700 = vmatprep.subr.mxu0 0.0
      %701 = vmatpush1.msra.mxu0 0.0
      %702 = vmatprep.subr.mxu0 0.0
      %703 = vmatpush1.msra.mxu0 0.0
      %704 = vmatprep.subr.mxu0 0.0
      %705 = vmatpush1.msra.mxu0 0.0
      %706 = vmatprep.subr.mxu0 0.0
      %707 = vmatpush1.msra.mxu0 0.0
      %708 = vmatprep.subr.mxu0 0.0
      %709 = vmatpush1.msra.mxu0 0.0
      %710 = vmatprep.subr.mxu0 0.0
      %711 = vmatpush1.msra.mxu0 0.0
      %712 = vmatprep.subr.mxu0 0.0
      %713 = vmatpush1.msra.mxu0 0.0
      %714 = vmatprep.subr.mxu0 0.0
      %715 = vmatpush1.msra.mxu0 0.0
      %716 = vmatprep.subr.mxu0 0.0
      %717 = vmatpush1.msra.mxu0 0.0
      %718 = vmatprep.subr.mxu0 0.0
      %719 = vmatpush1.msra.mxu0 0.0
      %720 = vmatprep.subr.mxu0 0.0
      %721 = vmatpush1.msra.mxu0 0.0
      %722 = vmatprep.subr.mxu0 0.0
      %723 = vmatpush1.msra.mxu0 0.0
      %724 = vmatprep.subr.mxu0 0.0
      %725 = vmatpush1.msra.mxu0 0.0
      %726 = vmatprep.subr.mxu0 0.0
      %727 = vmatpush1.msra.mxu0 0.0
      %728 = vmatprep.subr.mxu0 0.0
      %729 = vmatpush1.msra.mxu0 0.0
      %730 = vmatprep.subr.mxu0 0.0
      %731 = vmatpush1.msra.mxu0 0.0
      %732 = vmatprep.subr.mxu0 0.0
      %733 = vmatpush1.msra.mxu0 0.0
      %734 = vmatprep.subr.mxu0 0.0
      %735 = vmatpush1.msra.mxu0 0.0
      %736 = vmatprep.subr.mxu0 0.0
      %737 = vmatpush1.msra.mxu0 0.0
      %738 = vmatprep.subr.mxu0 0.0
      %739 = vmatpush1.msra.mxu0 0.0
      %740 = vmatprep.subr.mxu0 0.0
      %741 = vmatpush1.msra.mxu0 0.0
      %742 = vmatprep.subr.mxu0 0.0
      %743 = vmatpush1.msra.mxu0 0.0
      %744 = vmatprep.subr.mxu0 0.0
      %745 = vmatpush1.msra.mxu0 0.0
      %746 = vmatprep.mubr.f32.mxu0 0.0
      %747 = vmatmul.mubr.f32.gmra.mrb[0].mxu0 %v671
      %v748 = vpop.f32.mrb[0].mxu0
      %v749 = vadd.f32 0.0, %v748
      %v750 = vpop.f32.mrb[0].mxu0
      %v751 = vadd.f32 0.0, %v750
      %752 = vmatprep.mubr.f32.mxu0 0.0
      %753 = vmatmul.mubr.f32.gmra.mrb[0].mxu0 %v674
      %v754 = vpop.f32.mrb[0].mxu0
      %v755 = vadd.f32 0.0, %v754
      %v756 = vpop.f32.mrb[0].mxu0
      %v757 = vadd.f32 0.0, %v756
      %758 = vmatprep.mubr.f32.mxu0 0.0
      %759 = vmatmul.mubr.f32.gmra.mrb[0].mxu0 %v677
      %v760 = vpop.f32.mrb[0].mxu0
      %v761 = vadd.f32 0.0, %v760
      %v762 = vpop.f32.mrb[0].mxu0
      %v763 = vadd.f32 0.0, %v762
      %764 = vmatprep.mubr.f32.mxu0 0.0
      %765 = vmatmul.mubr.f32.gmra.mrb[0].mxu0 %v680
      %v766 = vpop.f32.mrb[0].mxu0
      %v767 = vadd.f32 0.0, %v766
      %v768 = vpop.f32.mrb[0].mxu0
      %v769 = vadd.f32 0.0, %v768
      %770 = vdwg.mxu0
      %771 = vmatprep.subr.mxu0 0.0
      %772 = vmatpush1.msra.mxu0 %v652
      %773 = vmatprep.subr.mxu0 0.0
      %774 = vmatpush1.msra.mxu0 %v658
      %775 = vmatprep.subr.mxu0 0.0
      %776 = vmatpush1.msra.mxu0 0.0
      %777 = vmatprep.subr.mxu0 0.0
      %778 = vmatpush1.msra.mxu0 0.0
      %779 = vmatprep.subr.mxu0 0.0
      %780 = vmatpush1.msra.mxu0 0.0
      %781 = vmatprep.subr.mxu0 0.0
      %782 = vmatpush1.msra.mxu0 0.0
      %783 = vmatprep.subr.mxu0 0.0
      %784 = vmatpush1.msra.mxu0 0.0
      %785 = vmatprep.subr.mxu0 0.0
      %786 = vmatpush1.msra.mxu0 0.0
      %787 = vmatprep.subr.mxu0 0.0
      %788 = vmatpush1.msra.mxu0 0.0
      %789 = vmatprep.subr.mxu0 0.0
      %790 = vmatpush1.msra.mxu0 0.0
      %791 = vmatprep.subr.mxu0 0.0
      %792 = vmatpush1.msra.mxu0 0.0
      %793 = vmatprep.subr.mxu0 0.0
      %794 = vmatpush1.msra.mxu0 0.0
      %795 = vmatprep.subr.mxu0 0.0
      %796 = vmatpush1.msra.mxu0 0.0
      %797 = vmatprep.subr.mxu0 0.0
      %798 = vmatpush1.msra.mxu0 0.0
      %799 = vmatprep.subr.mxu0 0.0
      %800 = vmatpush1.msra.mxu0 0.0
      %801 = vmatprep.subr.mxu0 0.0
      %802 = vmatpush1.msra.mxu0 0.0
      %803 = vmatprep.subr.mxu0 0.0
      %804 = vmatpush1.msra.mxu0 0.0
      %805 = vmatprep.subr.mxu0 0.0
      %806 = vmatpush1.msra.mxu0 0.0
      %807 = vmatprep.subr.mxu0 0.0
      %808 = vmatpush1.msra.mxu0 0.0
      %809 = vmatprep.subr.mxu0 0.0
      %810 = vmatpush1.msra.mxu0 0.0
      %811 = vmatprep.subr.mxu0 0.0
      %812 = vmatpush1.msra.mxu0 0.0
      %813 = vmatprep.subr.mxu0 0.0
      %814 = vmatpush1.msra.mxu0 0.0
      %815 = vmatprep.subr.mxu0 0.0
      %816 = vmatpush1.msra.mxu0 0.0
      %817 = vmatprep.subr.mxu0 0.0
      %818 = vmatpush1.msra.mxu0 0.0
      %819 = vmatprep.subr.mxu0 0.0
      %820 = vmatpush1.msra.mxu0 0.0
      %821 = vmatprep.subr.mxu0 0.0
      %822 = vmatpush1.msra.mxu0 0.0
      %823 = vmatprep.subr.mxu0 0.0
      %824 = vmatpush1.msra.mxu0 0.0
      %825 = vmatprep.subr.mxu0 0.0
      %826 = vmatpush1.msra.mxu0 0.0
      %827 = vmatprep.subr.mxu0 0.0
      %828 = vmatpush1.msra.mxu0 0.0
      %829 = vmatprep.subr.mxu0 0.0
      %830 = vmatpush1.msra.mxu0 0.0
      %831 = vmatprep.subr.mxu0 0.0
      %832 = vmatpush1.msra.mxu0 0.0
      %833 = vmatprep.subr.mxu0 0.0
      %834 = vmatpush1.msra.mxu0 0.0
      %835 = vmatprep.mubr.f32.mxu0 0.0
      %836 = vmatmul.mubr.f32.gmra.mrb[0].mxu0 %v671
      %v837 = vpop.f32.mrb[0].mxu0
      %v838 = vadd.f32 0.0, %v837
      %v839 = vpop.f32.mrb[0].mxu0
      %840 = vmatprep.mubr.f32.mxu0 0.0
      %841 = vmatmul.mubr.f32.gmra.mrb[0].mxu0 %v674
      %v842 = vpop.f32.mrb[0].mxu0
      %v843 = vadd.f32 0.0, %v842
      %v844 = vpop.f32.mrb[0].mxu0
      %845 = vmatprep.mubr.f32.mxu0 0.0
      %846 = vmatmul.mubr.f32.gmra.mrb[0].mxu0 %v677
      %v847 = vpop.f32.mrb[0].mxu0
      %v848 = vadd.f32 0.0, %v847
      %v849 = vpop.f32.mrb[0].mxu0
      %850 = vmatprep.mubr.f32.mxu0 0.0
      %851 = vmatmul.mubr.f32.gmra.mrb[0].mxu0 %v680
      %v852 = vpop.f32.mrb[0].mxu0
      %v853 = vadd.f32 0.0, %v852
      %v854 = vpop.f32.mrb[0].mxu0
      %855 = vdwg.mxu0
      %v856 = vadd.f32 %v535, %v749
      %v857 = vadd.f32 %v537, %v751
      %v858 = vadd.f32 %v624, %v838
      %v859 = vadd.f32 %v541, %v755
      %v860 = vadd.f32 %v543, %v757
      %v861 = vadd.f32 %v629, %v843
      %v862 = vadd.f32 %v547, %v761
      %v863 = vadd.f32 %v549, %v763
      %v864 = vadd.f32 %v634, %v848
      %v865 = vadd.f32 %v553, %v767
      %v866 = vadd.f32 %v555, %v769
      %v867 = vadd.f32 %v639, %v853
      %s868 = scalar_lea.vmem %s1, 96
      %v869 = vld [vmem:[%s868] sm:$0xff]
      %v870 = vld [vmem:[%s868 + $0x8] sm:$0xff]
      %v871 = vld [vmem:[%s868 + $0x10] sm:$0xff]
      %v872 = vld [vmem:[%s868 + $0x18] sm:$0xff]
      %873 = vrot.lane.b32.xlu0 %v225, 110
      %v874 = vpop.permute.xlu0 %873
      %875 = vrot.lane.b32.xlu0 %v226, 110
      %v876 = vpop.permute.xlu0 %875
      %877 = vrot.lane.b32.xlu0 %v227, 110
      %v878 = vpop.permute.xlu0 %877
      %879 = vrot.lane.b32.xlu0 %v228, 110
      %v880 = vpop.permute.xlu0 %879
      %881 = vrot.lane.b32.xlu0 %v229, 110
      %v882 = vpop.permute.xlu0 %881
      %883 = vrot.lane.b32.xlu0 %v230, 110
      %v884 = vpop.permute.xlu0 %883
      %vm885 = vcmask 900096
      %v886 = vsel %vm885, %v874, %v876
      %v887 = vsel %vm885, %v876, %v878
      %v888 = vsel %vm885, %v880, %v882
      %v889 = vsel %vm885, %v882, %v884
      %v897 = vsel %vm269, %v869, 0
      %v900 = vsel %vm269, %v870, 0
      %v903 = vsel %vm269, %v871, 0
      %v906 = vsel %vm269, %v872, 0
      %908 = vmatprep.subr.mxu0 %v887
      %909 = vmatpush1.msra.mxu0 %v886
      %910 = vmatprep.subr.mxu0 %v889
      %911 = vmatpush1.msra.mxu0 %v888
      %912 = vmatprep.subr.mxu0 0.0
      %913 = vmatpush1.msra.mxu0 0.0
      %914 = vmatprep.subr.mxu0 0.0
      %915 = vmatpush1.msra.mxu0 0.0
      %916 = vmatprep.subr.mxu0 0.0
      %917 = vmatpush1.msra.mxu0 0.0
      %918 = vmatprep.subr.mxu0 0.0
      %919 = vmatpush1.msra.mxu0 0.0
      %920 = vmatprep.subr.mxu0 0.0
      %921 = vmatpush1.msra.mxu0 0.0
      %922 = vmatprep.subr.mxu0 0.0
      %923 = vmatpush1.msra.mxu0 0.0
      %924 = vmatprep.subr.mxu0 0.0
      %925 = vmatpush1.msra.mxu0 0.0
      %926 = vmatprep.subr.mxu0 0.0
      %927 = vmatpush1.msra.mxu0 0.0
      %928 = vmatprep.subr.mxu0 0.0
      %929 = vmatpush1.msra.mxu0 0.0
      %930 = vmatprep.subr.mxu0 0.0
      %931 = vmatpush1.msra.mxu0 0.0
      %932 = vmatprep.subr.mxu0 0.0
      %933 = vmatpush1.msra.mxu0 0.0
      %934 = vmatprep.subr.mxu0 0.0
      %935 = vmatpush1.msra.mxu0 0.0
      %936 = vmatprep.subr.mxu0 0.0
      %937 = vmatpush1.msra.mxu0 0.0
      %938 = vmatprep.subr.mxu0 0.0
      %939 = vmatpush1.msra.mxu0 0.0
      %940 = vmatprep.subr.mxu0 0.0
      %941 = vmatpush1.msra.mxu0 0.0
      %942 = vmatprep.subr.mxu0 0.0
      %943 = vmatpush1.msra.mxu0 0.0
      %944 = vmatprep.subr.mxu0 0.0
      %945 = vmatpush1.msra.mxu0 0.0
      %946 = vmatprep.subr.mxu0 0.0
      %947 = vmatpush1.msra.mxu0 0.0
      %948 = vmatprep.subr.mxu0 0.0
      %949 = vmatpush1.msra.mxu0 0.0
      %950 = vmatprep.subr.mxu0 0.0
      %951 = vmatpush1.msra.mxu0 0.0
      %952 = vmatprep.subr.mxu0 0.0
      %953 = vmatpush1.msra.mxu0 0.0
      %954 = vmatprep.subr.mxu0 0.0
      %955 = vmatpush1.msra.mxu0 0.0
      %956 = vmatprep.subr.mxu0 0.0
      %957 = vmatpush1.msra.mxu0 0.0
      %958 = vmatprep.subr.mxu0 0.0
      %959 = vmatpush1.msra.mxu0 0.0
      %960 = vmatprep.subr.mxu0 0.0
      %961 = vmatpush1.msra.mxu0 0.0
      %962 = vmatprep.subr.mxu0 0.0
      %963 = vmatpush1.msra.mxu0 0.0
      %964 = vmatprep.subr.mxu0 0.0
      %965 = vmatpush1.msra.mxu0 0.0
      %966 = vmatprep.subr.mxu0 0.0
      %967 = vmatpush1.msra.mxu0 0.0
      %968 = vmatprep.subr.mxu0 0.0
      %969 = vmatpush1.msra.mxu0 0.0
      %970 = vmatprep.subr.mxu0 0.0
      %971 = vmatpush1.msra.mxu0 0.0
      %972 = vmatprep.mubr.f32.mxu0 0.0
      %973 = vmatmul.mubr.f32.gmra.mrb[0].mxu0 %v897
      %v974 = vpop.f32.mrb[0].mxu0
      %v975 = vadd.f32 0.0, %v974
      %v976 = vpop.f32.mrb[0].mxu0
      %v977 = vadd.f32 0.0, %v976
      %978 = vmatprep.mubr.f32.mxu0 0.0
      %979 = vmatmul.mubr.f32.gmra.mrb[0].mxu0 %v900
      %v980 = vpop.f32.mrb[0].mxu0
      %v981 = vadd.f32 0.0, %v980
      %v982 = vpop.f32.mrb[0].mxu0
      %v983 = vadd.f32 0.0, %v982
      %984 = vmatprep.mubr.f32.mxu0 0.0
      %985 = vmatmul.mubr.f32.gmra.mrb[0].mxu0 %v903
      %v986 = vpop.f32.mrb[0].mxu0
      %v987 = vadd.f32 0.0, %v986
      %v988 = vpop.f32.mrb[0].mxu0
      %v989 = vadd.f32 0.0, %v988
      %990 = vmatprep.mubr.f32.mxu0 0.0
      %991 = vmatmul.mubr.f32.gmra.mrb[0].mxu0 %v906
      %v992 = vpop.f32.mrb[0].mxu0
      %v993 = vadd.f32 0.0, %v992
      %v994 = vpop.f32.mrb[0].mxu0
      %v995 = vadd.f32 0.0, %v994
      %996 = vdwg.mxu0
      %997 = vmatprep.subr.mxu0 0.0
      %998 = vmatpush1.msra.mxu0 %v878
      %999 = vmatprep.subr.mxu0 0.0
      %1000 = vmatpush1.msra.mxu0 %v884
      %1001 = vmatprep.subr.mxu0 0.0
      %1002 = vmatpush1.msra.mxu0 0.0
      %1003 = vmatprep.subr.mxu0 0.0
      %1004 = vmatpush1.msra.mxu0 0.0
      %1005 = vmatprep.subr.mxu0 0.0
      %1006 = vmatpush1.msra.mxu0 0.0
      %1007 = vmatprep.subr.mxu0 0.0
      %1008 = vmatpush1.msra.mxu0 0.0
      %1009 = vmatprep.subr.mxu0 0.0
      %1010 = vmatpush1.msra.mxu0 0.0
      %1011 = vmatprep.subr.mxu0 0.0
      %1012 = vmatpush1.msra.mxu0 0.0
      %1013 = vmatprep.subr.mxu0 0.0
      %1014 = vmatpush1.msra.mxu0 0.0
      %1015 = vmatprep.subr.mxu0 0.0
      %1016 = vmatpush1.msra.mxu0 0.0
      %1017 = vmatprep.subr.mxu0 0.0
      %1018 = vmatpush1.msra.mxu0 0.0
      %1019 = vmatprep.subr.mxu0 0.0
      %1020 = vmatpush1.msra.mxu0 0.0
      %1021 = vmatprep.subr.mxu0 0.0
      %1022 = vmatpush1.msra.mxu0 0.0
      %1023 = vmatprep.subr.mxu0 0.0
      %1024 = vmatpush1.msra.mxu0 0.0
      %1025 = vmatprep.subr.mxu0 0.0
      %1026 = vmatpush1.msra.mxu0 0.0
      %1027 = vmatprep.subr.mxu0 0.0
      %1028 = vmatpush1.msra.mxu0 0.0
      %1029 = vmatprep.subr.mxu0 0.0
      %1030 = vmatpush1.msra.mxu0 0.0
      %1031 = vmatprep.subr.mxu0 0.0
      %1032 = vmatpush1.msra.mxu0 0.0
      %1033 = vmatprep.subr.mxu0 0.0
      %1034 = vmatpush1.msra.mxu0 0.0
      %1035 = vmatprep.subr.mxu0 0.0
      %1036 = vmatpush1.msra.mxu0 0.0
      %1037 = vmatprep.subr.mxu0 0.0
      %1038 = vmatpush1.msra.mxu0 0.0
      %1039 = vmatprep.subr.mxu0 0.0
      %1040 = vmatpush1.msra.mxu0 0.0
      %1041 = vmatprep.subr.mxu0 0.0
      %1042 = vmatpush1.msra.mxu0 0.0
      %1043 = vmatprep.subr.mxu0 0.0
      %1044 = vmatpush1.msra.mxu0 0.0
      %1045 = vmatprep.subr.mxu0 0.0
      %1046 = vmatpush1.msra.mxu0 0.0
      %1047 = vmatprep.subr.mxu0 0.0
      %1048 = vmatpush1.msra.mxu0 0.0
      %1049 = vmatprep.subr.mxu0 0.0
      %1050 = vmatpush1.msra.mxu0 0.0
      %1051 = vmatprep.subr.mxu0 0.0
      %1052 = vmatpush1.msra.mxu0 0.0
      %1053 = vmatprep.subr.mxu0 0.0
      %1054 = vmatpush1.msra.mxu0 0.0
      %1055 = vmatprep.subr.mxu0 0.0
      %1056 = vmatpush1.msra.mxu0 0.0
      %1057 = vmatprep.subr.mxu0 0.0
      %1058 = vmatpush1.msra.mxu0 0.0
      %1059 = vmatprep.subr.mxu0 0.0
      %1060 = vmatpush1.msra.mxu0 0.0
      %1061 = vmatprep.mubr.f32.mxu0 0.0
      %1062 = vmatmul.mubr.f32.gmra.mrb[0].mxu0 %v897
      %v1063 = vpop.f32.mrb[0].mxu0
      %v1064 = vadd.f32 0.0, %v1063
      %v1065 = vpop.f32.mrb[0].mxu0
      %1066 = vmatprep.mubr.f32.mxu0 0.0
      %1067 = vmatmul.mubr.f32.gmra.mrb[0].mxu0 %v900
      %v1068 = vpop.f32.mrb[0].mxu0
      %v1069 = vadd.f32 0.0, %v1068
      %v1070 = vpop.f32.mrb[0].mxu0
      %1071 = vmatprep.mubr.f32.mxu0 0.0
      %1072 = vmatmul.mubr.f32.gmra.mrb[0].mxu0 %v903
      %v1073 = vpop.f32.mrb[0].mxu0
      %v1074 = vadd.f32 0.0, %v1073
      %v1075 = vpop.f32.mrb[0].mxu0
      %1076 = vmatprep.mubr.f32.mxu0 0.0
      %1077 = vmatmul.mubr.f32.gmra.mrb[0].mxu0 %v906
      %v1078 = vpop.f32.mrb[0].mxu0
      %v1079 = vadd.f32 0.0, %v1078
      %v1080 = vpop.f32.mrb[0].mxu0
      %1081 = vdwg.mxu0
      %v1082 = vadd.f32 %v856, %v975
      %v1083 = vadd.f32 %v857, %v977
      %v1084 = vadd.f32 %v858, %v1064
      %v1085 = vadd.f32 %v859, %v981
      %v1086 = vadd.f32 %v860, %v983
      %v1087 = vadd.f32 %v861, %v1069
      %v1088 = vadd.f32 %v862, %v987
      %v1089 = vadd.f32 %v863, %v989
      %v1090 = vadd.f32 %v864, %v1074
      %v1091 = vadd.f32 %v865, %v993
      %v1092 = vadd.f32 %v866, %v995
      %v1093 = vadd.f32 %v867, %v1079
      %s1094 = scalar_lea.vmem %s1, 128
      %v1095 = vld [vmem:[%s1094] sm:$0xff]
      %v1096 = vld [vmem:[%s1094 + $0x8] sm:$0xff]
      %v1097 = vld [vmem:[%s1094 + $0x10] sm:$0xff]
      %v1098 = vld [vmem:[%s1094 + $0x18] sm:$0xff]
      %1099 = vrot.lane.b32.xlu0 %v225, 109
      %v1100 = vpop.permute.xlu0 %1099
      %1101 = vrot.lane.b32.xlu0 %v226, 109
      %v1102 = vpop.permute.xlu0 %1101
      %1103 = vrot.lane.b32.xlu0 %v227, 109
      %v1104 = vpop.permute.xlu0 %1103
      %1105 = vrot.lane.b32.xlu0 %v228, 109
      %v1106 = vpop.permute.xlu0 %1105
      %1107 = vrot.lane.b32.xlu0 %v229, 109
      %v1108 = vpop.permute.xlu0 %1107
      %1109 = vrot.lane.b32.xlu0 %v230, 109
      %v1110 = vpop.permute.xlu0 %1109
      %vm1111 = vcmask 891904
      %v1112 = vsel %vm1111, %v1100, %v1102
      %v1113 = vsel %vm1111, %v1102, %v1104
      %v1114 = vsel %vm1111, %v1106, %v1108
      %v1115 = vsel %vm1111, %v1108, %v1110
      %v1123 = vsel %vm269, %v1095, 0
      %v1126 = vsel %vm269, %v1096, 0
      %v1129 = vsel %vm269, %v1097, 0
      %v1132 = vsel %vm269, %v1098, 0
      %1134 = vmatprep.subr.mxu0 %v1113
      %1135 = vmatpush1.msra.mxu0 %v1112
      %1136 = vmatprep.subr.mxu0 %v1115
      %1137 = vmatpush1.msra.mxu0 %v1114
      %1138 = vmatprep.subr.mxu0 0.0
      %1139 = vmatpush1.msra.mxu0 0.0
      %1140 = vmatprep.subr.mxu0 0.0
      %1141 = vmatpush1.msra.mxu0 0.0
      %1142 = vmatprep.subr.mxu0 0.0
      %1143 = vmatpush1.msra.mxu0 0.0
      %1144 = vmatprep.subr.mxu0 0.0
      %1145 = vmatpush1.msra.mxu0 0.0
      %1146 = vmatprep.subr.mxu0 0.0
      %1147 = vmatpush1.msra.mxu0 0.0
      %1148 = vmatprep.subr.mxu0 0.0
      %1149 = vmatpush1.msra.mxu0 0.0
      %1150 = vmatprep.subr.mxu0 0.0
      %1151 = vmatpush1.msra.mxu0 0.0
      %1152 = vmatprep.subr.mxu0 0.0
      %1153 = vmatpush1.msra.mxu0 0.0
      %1154 = vmatprep.subr.mxu0 0.0
      %1155 = vmatpush1.msra.mxu0 0.0
      %1156 = vmatprep.subr.mxu0 0.0
      %1157 = vmatpush1.msra.mxu0 0.0
      %1158 = vmatprep.subr.mxu0 0.0
      %1159 = vmatpush1.msra.mxu0 0.0
      %1160 = vmatprep.subr.mxu0 0.0
      %1161 = vmatpush1.msra.mxu0 0.0
      %1162 = vmatprep.subr.mxu0 0.0
      %1163 = vmatpush1.msra.mxu0 0.0
      %1164 = vmatprep.subr.mxu0 0.0
      %1165 = vmatpush1.msra.mxu0 0.0
      %1166 = vmatprep.subr.mxu0 0.0
      %1167 = vmatpush1.msra.mxu0 0.0
      %1168 = vmatprep.subr.mxu0 0.0
      %1169 = vmatpush1.msra.mxu0 0.0
      %1170 = vmatprep.subr.mxu0 0.0
      %1171 = vmatpush1.msra.mxu0 0.0
      %1172 = vmatprep.subr.mxu0 0.0
      %1173 = vmatpush1.msra.mxu0 0.0
      %1174 = vmatprep.subr.mxu0 0.0
      %1175 = vmatpush1.msra.mxu0 0.0
      %1176 = vmatprep.subr.mxu0 0.0
      %1177 = vmatpush1.msra.mxu0 0.0
      %1178 = vmatprep.subr.mxu0 0.0
      %1179 = vmatpush1.msra.mxu0 0.0
      %1180 = vmatprep.subr.mxu0 0.0
      %1181 = vmatpush1.msra.mxu0 0.0
      %1182 = vmatprep.subr.mxu0 0.0
      %1183 = vmatpush1.msra.mxu0 0.0
      %1184 = vmatprep.subr.mxu0 0.0
      %1185 = vmatpush1.msra.mxu0 0.0
      %1186 = vmatprep.subr.mxu0 0.0
      %1187 = vmatpush1.msra.mxu0 0.0
      %1188 = vmatprep.subr.mxu0 0.0
      %1189 = vmatpush1.msra.mxu0 0.0
      %1190 = vmatprep.subr.mxu0 0.0
      %1191 = vmatpush1.msra.mxu0 0.0
      %1192 = vmatprep.subr.mxu0 0.0
      %1193 = vmatpush1.msra.mxu0 0.0
      %1194 = vmatprep.subr.mxu0 0.0
      %1195 = vmatpush1.msra.mxu0 0.0
      %1196 = vmatprep.subr.mxu0 0.0
      %1197 = vmatpush1.msra.mxu0 0.0
      %1198 = vmatprep.mubr.f32.mxu0 0.0
      %1199 = vmatmul.mubr.f32.gmra.mrb[0].mxu0 %v1123
      %v1200 = vpop.f32.mrb[0].mxu0
      %v1201 = vadd.f32 0.0, %v1200
      %v1202 = vpop.f32.mrb[0].mxu0
      %v1203 = vadd.f32 0.0, %v1202
      %1204 = vmatprep.mubr.f32.mxu0 0.0
      %1205 = vmatmul.mubr.f32.gmra.mrb[0].mxu0 %v1126
      %v1206 = vpop.f32.mrb[0].mxu0
      %v1207 = vadd.f32 0.0, %v1206
      %v1208 = vpop.f32.mrb[0].mxu0
      %v1209 = vadd.f32 0.0, %v1208
      %1210 = vmatprep.mubr.f32.mxu0 0.0
      %1211 = vmatmul.mubr.f32.gmra.mrb[0].mxu0 %v1129
      %v1212 = vpop.f32.mrb[0].mxu0
      %v1213 = vadd.f32 0.0, %v1212
      %v1214 = vpop.f32.mrb[0].mxu0
      %v1215 = vadd.f32 0.0, %v1214
      %1216 = vmatprep.mubr.f32.mxu0 0.0
      %1217 = vmatmul.mubr.f32.gmra.mrb[0].mxu0 %v1132
      %v1218 = vpop.f32.mrb[0].mxu0
      %v1219 = vadd.f32 0.0, %v1218
      %v1220 = vpop.f32.mrb[0].mxu0
      %v1221 = vadd.f32 0.0, %v1220
      %1222 = vdwg.mxu0
      %1223 = vmatprep.subr.mxu0 0.0
      %1224 = vmatpush1.msra.mxu0 %v1104
      %1225 = vmatprep.subr.mxu0 0.0
      %1226 = vmatpush1.msra.mxu0 %v1110
      %1227 = vmatprep.subr.mxu0 0.0
      %1228 = vmatpush1.msra.mxu0 0.0
      %1229 = vmatprep.subr.mxu0 0.0
      %1230 = vmatpush1.msra.mxu0 0.0
      %1231 = vmatprep.subr.mxu0 0.0
      %1232 = vmatpush1.msra.mxu0 0.0
      %1233 = vmatprep.subr.mxu0 0.0
      %1234 = vmatpush1.msra.mxu0 0.0
      %1235 = vmatprep.subr.mxu0 0.0
      %1236 = vmatpush1.msra.mxu0 0.0
      %1237 = vmatprep.subr.mxu0 0.0
      %1238 = vmatpush1.msra.mxu0 0.0
      %1239 = vmatprep.subr.mxu0 0.0
      %1240 = vmatpush1.msra.mxu0 0.0
      %1241 = vmatprep.subr.mxu0 0.0
      %1242 = vmatpush1.msra.mxu0 0.0
      %1243 = vmatprep.subr.mxu0 0.0
      %1244 = vmatpush1.msra.mxu0 0.0
      %1245 = vmatprep.subr.mxu0 0.0
      %1246 = vmatpush1.msra.mxu0 0.0
      %1247 = vmatprep.subr.mxu0 0.0
      %1248 = vmatpush1.msra.mxu0 0.0
      %1249 = vmatprep.subr.mxu0 0.0
      %1250 = vmatpush1.msra.mxu0 0.0
      %1251 = vmatprep.subr.mxu0 0.0
      %1252 = vmatpush1.msra.mxu0 0.0
      %1253 = vmatprep.subr.mxu0 0.0
      %1254 = vmatpush1.msra.mxu0 0.0
      %1255 = vmatprep.subr.mxu0 0.0
      %1256 = vmatpush1.msra.mxu0 0.0
      %1257 = vmatprep.subr.mxu0 0.0
      %1258 = vmatpush1.msra.mxu0 0.0
      %1259 = vmatprep.subr.mxu0 0.0
      %1260 = vmatpush1.msra.mxu0 0.0
      %1261 = vmatprep.subr.mxu0 0.0
      %1262 = vmatpush1.msra.mxu0 0.0
      %1263 = vmatprep.subr.mxu0 0.0
      %1264 = vmatpush1.msra.mxu0 0.0
      %1265 = vmatprep.subr.mxu0 0.0
      %1266 = vmatpush1.msra.mxu0 0.0
      %1267 = vmatprep.subr.mxu0 0.0
      %1268 = vmatpush1.msra.mxu0 0.0
      %1269 = vmatprep.subr.mxu0 0.0
      %1270 = vmatpush1.msra.mxu0 0.0
      %1271 = vmatprep.subr.mxu0 0.0
      %1272 = vmatpush1.msra.mxu0 0.0
      %1273 = vmatprep.subr.mxu0 0.0
      %1274 = vmatpush1.msra.mxu0 0.0
      %1275 = vmatprep.subr.mxu0 0.0
      %1276 = vmatpush1.msra.mxu0 0.0
      %1277 = vmatprep.subr.mxu0 0.0
      %1278 = vmatpush1.msra.mxu0 0.0
      %1279 = vmatprep.subr.mxu0 0.0
      %1280 = vmatpush1.msra.mxu0 0.0
      %1281 = vmatprep.subr.mxu0 0.0
      %1282 = vmatpush1.msra.mxu0 0.0
      %1283 = vmatprep.subr.mxu0 0.0
      %1284 = vmatpush1.msra.mxu0 0.0
      %1285 = vmatprep.subr.mxu0 0.0
      %1286 = vmatpush1.msra.mxu0 0.0
      %1287 = vmatprep.mubr.f32.mxu0 0.0
      %1288 = vmatmul.mubr.f32.gmra.mrb[0].mxu0 %v1123
      %v1289 = vpop.f32.mrb[0].mxu0
      %v1290 = vadd.f32 0.0, %v1289
      %v1291 = vpop.f32.mrb[0].mxu0
      %1292 = vmatprep.mubr.f32.mxu0 0.0
      %1293 = vmatmul.mubr.f32.gmra.mrb[0].mxu0 %v1126
      %v1294 = vpop.f32.mrb[0].mxu0
      %v1295 = vadd.f32 0.0, %v1294
      %v1296 = vpop.f32.mrb[0].mxu0
      %1297 = vmatprep.mubr.f32.mxu0 0.0
      %1298 = vmatmul.mubr.f32.gmra.mrb[0].mxu0 %v1129
      %v1299 = vpop.f32.mrb[0].mxu0
      %v1300 = vadd.f32 0.0, %v1299
      %v1301 = vpop.f32.mrb[0].mxu0
      %1302 = vmatprep.mubr.f32.mxu0 0.0
      %1303 = vmatmul.mubr.f32.gmra.mrb[0].mxu0 %v1132
      %v1304 = vpop.f32.mrb[0].mxu0
      %v1305 = vadd.f32 0.0, %v1304
      %v1306 = vpop.f32.mrb[0].mxu0
      %1307 = vdwg.mxu0
      %v1308 = vadd.f32 %v1082, %v1201
      %v1309 = vadd.f32 %v1083, %v1203
      %v1310 = vadd.f32 %v1084, %v1290
      %v1311 = vadd.f32 %v1085, %v1207
      %v1312 = vadd.f32 %v1086, %v1209
      %v1313 = vadd.f32 %v1087, %v1295
      %v1314 = vadd.f32 %v1088, %v1213
      %v1315 = vadd.f32 %v1089, %v1215
      %v1316 = vadd.f32 %v1090, %v1300
      %v1317 = vadd.f32 %v1091, %v1219
      %v1318 = vadd.f32 %v1092, %v1221
      %v1319 = vadd.f32 %v1093, %v1305
      %s1320 = scalar_lea.vmem %s1, 160
      %v1321 = vld [vmem:[%s1320] sm:$0xff]
      %v1322 = vld [vmem:[%s1320 + $0x8] sm:$0xff]
      %v1323 = vld [vmem:[%s1320 + $0x10] sm:$0xff]
      %v1324 = vld [vmem:[%s1320 + $0x18] sm:$0xff]
      %1325 = vrot.lane.b32.xlu0 %v225, 108
      %v1326 = vpop.permute.xlu0 %1325
      %1327 = vrot.lane.b32.xlu0 %v226, 108
      %v1328 = vpop.permute.xlu0 %1327
      %1329 = vrot.lane.b32.xlu0 %v227, 108
      %v1330 = vpop.permute.xlu0 %1329
      %1331 = vrot.lane.b32.xlu0 %v228, 108
      %v1332 = vpop.permute.xlu0 %1331
      %1333 = vrot.lane.b32.xlu0 %v229, 108
      %v1334 = vpop.permute.xlu0 %1333
      %1335 = vrot.lane.b32.xlu0 %v230, 108
      %v1336 = vpop.permute.xlu0 %1335
      %vm1337 = vcmask 883712
      %v1338 = vsel %vm1337, %v1326, %v1328
      %v1339 = vsel %vm1337, %v1328, %v1330
      %v1340 = vsel %vm1337, %v1332, %v1334
      %v1341 = vsel %vm1337, %v1334, %v1336
      %v1349 = vsel %vm269, %v1321, 0
      %v1352 = vsel %vm269, %v1322, 0
      %v1355 = vsel %vm269, %v1323, 0
      %v1358 = vsel %vm269, %v1324, 0
      %1360 = vmatprep.subr.mxu0 %v1339
      %1361 = vmatpush1.msra.mxu0 %v1338
      %1362 = vmatprep.subr.mxu0 %v1341
      %1363 = vmatpush1.msra.mxu0 %v1340
      %1364 = vmatprep.subr.mxu0 0.0
      %1365 = vmatpush1.msra.mxu0 0.0
      %1366 = vmatprep.subr.mxu0 0.0
      %1367 = vmatpush1.msra.mxu0 0.0
      %1368 = vmatprep.subr.mxu0 0.0
      %1369 = vmatpush1.msra.mxu0 0.0
      %1370 = vmatprep.subr.mxu0 0.0
      %1371 = vmatpush1.msra.mxu0 0.0
      %1372 = vmatprep.subr.mxu0 0.0
      %1373 = vmatpush1.msra.mxu0 0.0
      %1374 = vmatprep.subr.mxu0 0.0
      %1375 = vmatpush1.msra.mxu0 0.0
      %1376 = vmatprep.subr.mxu0 0.0
      %1377 = vmatpush1.msra.mxu0 0.0
      %1378 = vmatprep.subr.mxu0 0.0
      %1379 = vmatpush1.msra.mxu0 0.0
      %1380 = vmatprep.subr.mxu0 0.0
      %1381 = vmatpush1.msra.mxu0 0.0
      %1382 = vmatprep.subr.mxu0 0.0
      %1383 = vmatpush1.msra.mxu0 0.0
      %1384 = vmatprep.subr.mxu0 0.0
      %1385 = vmatpush1.msra.mxu0 0.0
      %1386 = vmatprep.subr.mxu0 0.0
      %1387 = vmatpush1.msra.mxu0 0.0
      %1388 = vmatprep.subr.mxu0 0.0
      %1389 = vmatpush1.msra.mxu0 0.0
      %1390 = vmatprep.subr.mxu0 0.0
      %1391 = vmatpush1.msra.mxu0 0.0
      %1392 = vmatprep.subr.mxu0 0.0
      %1393 = vmatpush1.msra.mxu0 0.0
      %1394 = vmatprep.subr.mxu0 0.0
      %1395 = vmatpush1.msra.mxu0 0.0
      %1396 = vmatprep.subr.mxu0 0.0
      %1397 = vmatpush1.msra.mxu0 0.0
      %1398 = vmatprep.subr.mxu0 0.0
      %1399 = vmatpush1.msra.mxu0 0.0
      %1400 = vmatprep.subr.mxu0 0.0
      %1401 = vmatpush1.msra.mxu0 0.0
      %1402 = vmatprep.subr.mxu0 0.0
      %1403 = vmatpush1.msra.mxu0 0.0
      %1404 = vmatprep.subr.mxu0 0.0
      %1405 = vmatpush1.msra.mxu0 0.0
      %1406 = vmatprep.subr.mxu0 0.0
      %1407 = vmatpush1.msra.mxu0 0.0
      %1408 = vmatprep.subr.mxu0 0.0
      %1409 = vmatpush1.msra.mxu0 0.0
      %1410 = vmatprep.subr.mxu0 0.0
      %1411 = vmatpush1.msra.mxu0 0.0
      %1412 = vmatprep.subr.mxu0 0.0
      %1413 = vmatpush1.msra.mxu0 0.0
      %1414 = vmatprep.subr.mxu0 0.0
      %1415 = vmatpush1.msra.mxu0 0.0
      %1416 = vmatprep.subr.mxu0 0.0
      %1417 = vmatpush1.msra.mxu0 0.0
      %1418 = vmatprep.subr.mxu0 0.0
      %1419 = vmatpush1.msra.mxu0 0.0
      %1420 = vmatprep.subr.mxu0 0.0
      %1421 = vmatpush1.msra.mxu0 0.0
      %1422 = vmatprep.subr.mxu0 0.0
      %1423 = vmatpush1.msra.mxu0 0.0
      %1424 = vmatprep.mubr.f32.mxu0 0.0
      %1425 = vmatmul.mubr.f32.gmra.mrb[0].mxu0 %v1349
      %v1426 = vpop.f32.mrb[0].mxu0
      %v1427 = vadd.f32 0.0, %v1426
      %v1428 = vpop.f32.mrb[0].mxu0
      %v1429 = vadd.f32 0.0, %v1428
      %1430 = vmatprep.mubr.f32.mxu0 0.0
      %1431 = vmatmul.mubr.f32.gmra.mrb[0].mxu0 %v1352
      %v1432 = vpop.f32.mrb[0].mxu0
      %v1433 = vadd.f32 0.0, %v1432
      %v1434 = vpop.f32.mrb[0].mxu0
      %v1435 = vadd.f32 0.0, %v1434
      %1436 = vmatprep.mubr.f32.mxu0 0.0
      %1437 = vmatmul.mubr.f32.gmra.mrb[0].mxu0 %v1355
      %v1438 = vpop.f32.mrb[0].mxu0
      %v1439 = vadd.f32 0.0, %v1438
      %v1440 = vpop.f32.mrb[0].mxu0
      %v1441 = vadd.f32 0.0, %v1440
      %1442 = vmatprep.mubr.f32.mxu0 0.0
      %1443 = vmatmul.mubr.f32.gmra.mrb[0].mxu0 %v1358
      %v1444 = vpop.f32.mrb[0].mxu0
      %v1445 = vadd.f32 0.0, %v1444
      %v1446 = vpop.f32.mrb[0].mxu0
      %v1447 = vadd.f32 0.0, %v1446
      %1448 = vdwg.mxu0
      %1449 = vmatprep.subr.mxu0 0.0
      %1450 = vmatpush1.msra.mxu0 %v1330
      %1451 = vmatprep.subr.mxu0 0.0
      %1452 = vmatpush1.msra.mxu0 %v1336
      %1453 = vmatprep.subr.mxu0 0.0
      %1454 = vmatpush1.msra.mxu0 0.0
      %1455 = vmatprep.subr.mxu0 0.0
      %1456 = vmatpush1.msra.mxu0 0.0
      %1457 = vmatprep.subr.mxu0 0.0
      %1458 = vmatpush1.msra.mxu0 0.0
      %1459 = vmatprep.subr.mxu0 0.0
      %1460 = vmatpush1.msra.mxu0 0.0
      %1461 = vmatprep.subr.mxu0 0.0
      %1462 = vmatpush1.msra.mxu0 0.0
      %1463 = vmatprep.subr.mxu0 0.0
      %1464 = vmatpush1.msra.mxu0 0.0
      %1465 = vmatprep.subr.mxu0 0.0
      %1466 = vmatpush1.msra.mxu0 0.0
      %1467 = vmatprep.subr.mxu0 0.0
      %1468 = vmatpush1.msra.mxu0 0.0
      %1469 = vmatprep.subr.mxu0 0.0
      %1470 = vmatpush1.msra.mxu0 0.0
      %1471 = vmatprep.subr.mxu0 0.0
      %1472 = vmatpush1.msra.mxu0 0.0
      %1473 = vmatprep.subr.mxu0 0.0
      %1474 = vmatpush1.msra.mxu0 0.0
      %1475 = vmatprep.subr.mxu0 0.0
      %1476 = vmatpush1.msra.mxu0 0.0
      %1477 = vmatprep.subr.mxu0 0.0
      %1478 = vmatpush1.msra.mxu0 0.0
      %1479 = vmatprep.subr.mxu0 0.0
      %1480 = vmatpush1.msra.mxu0 0.0
      %1481 = vmatprep.subr.mxu0 0.0
      %1482 = vmatpush1.msra.mxu0 0.0
      %1483 = vmatprep.subr.mxu0 0.0
      %1484 = vmatpush1.msra.mxu0 0.0
      %1485 = vmatprep.subr.mxu0 0.0
      %1486 = vmatpush1.msra.mxu0 0.0
      %1487 = vmatprep.subr.mxu0 0.0
      %1488 = vmatpush1.msra.mxu0 0.0
      %1489 = vmatprep.subr.mxu0 0.0
      %1490 = vmatpush1.msra.mxu0 0.0
      %1491 = vmatprep.subr.mxu0 0.0
      %1492 = vmatpush1.msra.mxu0 0.0
      %1493 = vmatprep.subr.mxu0 0.0
      %1494 = vmatpush1.msra.mxu0 0.0
      %1495 = vmatprep.subr.mxu0 0.0
      %1496 = vmatpush1.msra.mxu0 0.0
      %1497 = vmatprep.subr.mxu0 0.0
      %1498 = vmatpush1.msra.mxu0 0.0
      %1499 = vmatprep.subr.mxu0 0.0
      %1500 = vmatpush1.msra.mxu0 0.0
      %1501 = vmatprep.subr.mxu0 0.0
      %1502 = vmatpush1.msra.mxu0 0.0
      %1503 = vmatprep.subr.mxu0 0.0
      %1504 = vmatpush1.msra.mxu0 0.0
      %1505 = vmatprep.subr.mxu0 0.0
      %1506 = vmatpush1.msra.mxu0 0.0
      %1507 = vmatprep.subr.mxu0 0.0
      %1508 = vmatpush1.msra.mxu0 0.0
      %1509 = vmatprep.subr.mxu0 0.0
      %1510 = vmatpush1.msra.mxu0 0.0
      %1511 = vmatprep.subr.mxu0 0.0
      %1512 = vmatpush1.msra.mxu0 0.0
      %1513 = vmatprep.mubr.f32.mxu0 0.0
      %1514 = vmatmul.mubr.f32.gmra.mrb[0].mxu0 %v1349
      %v1515 = vpop.f32.mrb[0].mxu0
      %v1516 = vadd.f32 0.0, %v1515
      %v1517 = vpop.f32.mrb[0].mxu0
      %1518 = vmatprep.mubr.f32.mxu0 0.0
      %1519 = vmatmul.mubr.f32.gmra.mrb[0].mxu0 %v1352
      %v1520 = vpop.f32.mrb[0].mxu0
      %v1521 = vadd.f32 0.0, %v1520
      %v1522 = vpop.f32.mrb[0].mxu0
      %1523 = vmatprep.mubr.f32.mxu0 0.0
      %1524 = vmatmul.mubr.f32.gmra.mrb[0].mxu0 %v1355
      %v1525 = vpop.f32.mrb[0].mxu0
      %v1526 = vadd.f32 0.0, %v1525
      %v1527 = vpop.f32.mrb[0].mxu0
      %1528 = vmatprep.mubr.f32.mxu0 0.0
      %1529 = vmatmul.mubr.f32.gmra.mrb[0].mxu0 %v1358
      %v1530 = vpop.f32.mrb[0].mxu0
      %v1531 = vadd.f32 0.0, %v1530
      %v1532 = vpop.f32.mrb[0].mxu0
      %1533 = vdwg.mxu0
      %v1534 = vadd.f32 %v1308, %v1427
      %v1535 = vadd.f32 %v1309, %v1429
      %v1536 = vadd.f32 %v1310, %v1516
      %v1537 = vadd.f32 %v1311, %v1433
      %v1538 = vadd.f32 %v1312, %v1435
      %v1539 = vadd.f32 %v1313, %v1521
      %v1540 = vadd.f32 %v1314, %v1439
      %v1541 = vadd.f32 %v1315, %v1441
      %v1542 = vadd.f32 %v1316, %v1526
      %v1543 = vadd.f32 %v1317, %v1445
      %v1544 = vadd.f32 %v1318, %v1447
      %v1545 = vadd.f32 %v1319, %v1531
      %s1546 = scalar_lea.vmem %s1, 192
      %v1547 = vld [vmem:[%s1546] sm:$0xff]
      %v1548 = vld [vmem:[%s1546 + $0x8] sm:$0xff]
      %v1549 = vld [vmem:[%s1546 + $0x10] sm:$0xff]
      %v1550 = vld [vmem:[%s1546 + $0x18] sm:$0xff]
      %1551 = vrot.lane.b32.xlu0 %v225, 92
      %v1552 = vpop.permute.xlu0 %1551
      %1553 = vrot.lane.b32.xlu0 %v226, 92
      %v1554 = vpop.permute.xlu0 %1553
      %1555 = vrot.lane.b32.xlu0 %v227, 92
      %v1556 = vpop.permute.xlu0 %1555
      %1557 = vrot.lane.b32.xlu0 %v228, 92
      %v1558 = vpop.permute.xlu0 %1557
      %1559 = vrot.lane.b32.xlu0 %v229, 92
      %v1560 = vpop.permute.xlu0 %1559
      %1561 = vrot.lane.b32.xlu0 %v230, 92
      %v1562 = vpop.permute.xlu0 %1561
      %vm1563 = vcmask 752640
      %v1564 = vsel %vm1563, %v1552, %v1554
      %v1565 = vsel %vm1563, %v1554, %v1556
      %v1566 = vsel %vm1563, %v1558, %v1560
      %v1567 = vsel %vm1563, %v1560, %v1562
      %v1575 = vsel %vm269, %v1547, 0
      %v1578 = vsel %vm269, %v1548, 0
      %v1581 = vsel %vm269, %v1549, 0
      %v1584 = vsel %vm269, %v1550, 0
      %1586 = vmatprep.subr.mxu0 %v1565
      %1587 = vmatpush1.msra.mxu0 %v1564
      %1588 = vmatprep.subr.mxu0 %v1567
      %1589 = vmatpush1.msra.mxu0 %v1566
      %1590 = vmatprep.subr.mxu0 0.0
      %1591 = vmatpush1.msra.mxu0 0.0
      %1592 = vmatprep.subr.mxu0 0.0
      %1593 = vmatpush1.msra.mxu0 0.0
      %1594 = vmatprep.subr.mxu0 0.0
      %1595 = vmatpush1.msra.mxu0 0.0
      %1596 = vmatprep.subr.mxu0 0.0
      %1597 = vmatpush1.msra.mxu0 0.0
      %1598 = vmatprep.subr.mxu0 0.0
      %1599 = vmatpush1.msra.mxu0 0.0
      %1600 = vmatprep.subr.mxu0 0.0
      %1601 = vmatpush1.msra.mxu0 0.0
      %1602 = vmatprep.subr.mxu0 0.0
      %1603 = vmatpush1.msra.mxu0 0.0
      %1604 = vmatprep.subr.mxu0 0.0
      %1605 = vmatpush1.msra.mxu0 0.0
      %1606 = vmatprep.subr.mxu0 0.0
      %1607 = vmatpush1.msra.mxu0 0.0
      %1608 = vmatprep.subr.mxu0 0.0
      %1609 = vmatpush1.msra.mxu0 0.0
      %1610 = vmatprep.subr.mxu0 0.0
      %1611 = vmatpush1.msra.mxu0 0.0
      %1612 = vmatprep.subr.mxu0 0.0
      %1613 = vmatpush1.msra.mxu0 0.0
      %1614 = vmatprep.subr.mxu0 0.0
      %1615 = vmatpush1.msra.mxu0 0.0
      %1616 = vmatprep.subr.mxu0 0.0
      %1617 = vmatpush1.msra.mxu0 0.0
      %1618 = vmatprep.subr.mxu0 0.0
      %1619 = vmatpush1.msra.mxu0 0.0
      %1620 = vmatprep.subr.mxu0 0.0
      %1621 = vmatpush1.msra.mxu0 0.0
      %1622 = vmatprep.subr.mxu0 0.0
      %1623 = vmatpush1.msra.mxu0 0.0
      %1624 = vmatprep.subr.mxu0 0.0
      %1625 = vmatpush1.msra.mxu0 0.0
      %1626 = vmatprep.subr.mxu0 0.0
      %1627 = vmatpush1.msra.mxu0 0.0
      %1628 = vmatprep.subr.mxu0 0.0
      %1629 = vmatpush1.msra.mxu0 0.0
      %1630 = vmatprep.subr.mxu0 0.0
      %1631 = vmatpush1.msra.mxu0 0.0
      %1632 = vmatprep.subr.mxu0 0.0
      %1633 = vmatpush1.msra.mxu0 0.0
      %1634 = vmatprep.subr.mxu0 0.0
      %1635 = vmatpush1.msra.mxu0 0.0
      %1636 = vmatprep.subr.mxu0 0.0
      %1637 = vmatpush1.msra.mxu0 0.0
      %1638 = vmatprep.subr.mxu0 0.0
      %1639 = vmatpush1.msra.mxu0 0.0
      %1640 = vmatprep.subr.mxu0 0.0
      %1641 = vmatpush1.msra.mxu0 0.0
      %1642 = vmatprep.subr.mxu0 0.0
      %1643 = vmatpush1.msra.mxu0 0.0
      %1644 = vmatprep.subr.mxu0 0.0
      %1645 = vmatpush1.msra.mxu0 0.0
      %1646 = vmatprep.subr.mxu0 0.0
      %1647 = vmatpush1.msra.mxu0 0.0
      %1648 = vmatprep.subr.mxu0 0.0
      %1649 = vmatpush1.msra.mxu0 0.0
      %1650 = vmatprep.mubr.f32.mxu0 0.0
      %1651 = vmatmul.mubr.f32.gmra.mrb[0].mxu0 %v1575
      %v1652 = vpop.f32.mrb[0].mxu0
      %v1653 = vadd.f32 0.0, %v1652
      %v1654 = vpop.f32.mrb[0].mxu0
      %v1655 = vadd.f32 0.0, %v1654
      %1656 = vmatprep.mubr.f32.mxu0 0.0
      %1657 = vmatmul.mubr.f32.gmra.mrb[0].mxu0 %v1578
      %v1658 = vpop.f32.mrb[0].mxu0
      %v1659 = vadd.f32 0.0, %v1658
      %v1660 = vpop.f32.mrb[0].mxu0
      %v1661 = vadd.f32 0.0, %v1660
      %1662 = vmatprep.mubr.f32.mxu0 0.0
      %1663 = vmatmul.mubr.f32.gmra.mrb[0].mxu0 %v1581
      %v1664 = vpop.f32.mrb[0].mxu0
      %v1665 = vadd.f32 0.0, %v1664
      %v1666 = vpop.f32.mrb[0].mxu0
      %v1667 = vadd.f32 0.0, %v1666
      %1668 = vmatprep.mubr.f32.mxu0 0.0
      %1669 = vmatmul.mubr.f32.gmra.mrb[0].mxu0 %v1584
      %v1670 = vpop.f32.mrb[0].mxu0
      %v1671 = vadd.f32 0.0, %v1670
      %v1672 = vpop.f32.mrb[0].mxu0
      %v1673 = vadd.f32 0.0, %v1672
      %1674 = vdwg.mxu0
      %1675 = vmatprep.subr.mxu0 0.0
      %1676 = vmatpush1.msra.mxu0 %v1556
      %1677 = vmatprep.subr.mxu0 0.0
      %1678 = vmatpush1.msra.mxu0 %v1562
      %1679 = vmatprep.subr.mxu0 0.0
      %1680 = vmatpush1.msra.mxu0 0.0
      %1681 = vmatprep.subr.mxu0 0.0
      %1682 = vmatpush1.msra.mxu0 0.0
      %1683 = vmatprep.subr.mxu0 0.0
      %1684 = vmatpush1.msra.mxu0 0.0
      %1685 = vmatprep.subr.mxu0 0.0
      %1686 = vmatpush1.msra.mxu0 0.0
      %1687 = vmatprep.subr.mxu0 0.0
      %1688 = vmatpush1.msra.mxu0 0.0
      %1689 = vmatprep.subr.mxu0 0.0
      %1690 = vmatpush1.msra.mxu0 0.0
      %1691 = vmatprep.subr.mxu0 0.0
      %1692 = vmatpush1.msra.mxu0 0.0
      %1693 = vmatprep.subr.mxu0 0.0
      %1694 = vmatpush1.msra.mxu0 0.0
      %1695 = vmatprep.subr.mxu0 0.0
      %1696 = vmatpush1.msra.mxu0 0.0
      %1697 = vmatprep.subr.mxu0 0.0
      %1698 = vmatpush1.msra.mxu0 0.0
      %1699 = vmatprep.subr.mxu0 0.0
      %1700 = vmatpush1.msra.mxu0 0.0
      %1701 = vmatprep.subr.mxu0 0.0
      %1702 = vmatpush1.msra.mxu0 0.0
      %1703 = vmatprep.subr.mxu0 0.0
      %1704 = vmatpush1.msra.mxu0 0.0
      %1705 = vmatprep.subr.mxu0 0.0
      %1706 = vmatpush1.msra.mxu0 0.0
      %1707 = vmatprep.subr.mxu0 0.0
      %1708 = vmatpush1.msra.mxu0 0.0
      %1709 = vmatprep.subr.mxu0 0.0
      %1710 = vmatpush1.msra.mxu0 0.0
      %1711 = vmatprep.subr.mxu0 0.0
      %1712 = vmatpush1.msra.mxu0 0.0
      %1713 = vmatprep.subr.mxu0 0.0
      %1714 = vmatpush1.msra.mxu0 0.0
      %1715 = vmatprep.subr.mxu0 0.0
      %1716 = vmatpush1.msra.mxu0 0.0
      %1717 = vmatprep.subr.mxu0 0.0
      %1718 = vmatpush1.msra.mxu0 0.0
      %1719 = vmatprep.subr.mxu0 0.0
      %1720 = vmatpush1.msra.mxu0 0.0
      %1721 = vmatprep.subr.mxu0 0.0
      %1722 = vmatpush1.msra.mxu0 0.0
      %1723 = vmatprep.subr.mxu0 0.0
      %1724 = vmatpush1.msra.mxu0 0.0
      %1725 = vmatprep.subr.mxu0 0.0
      %1726 = vmatpush1.msra.mxu0 0.0
      %1727 = vmatprep.subr.mxu0 0.0
      %1728 = vmatpush1.msra.mxu0 0.0
      %1729 = vmatprep.subr.mxu0 0.0
      %1730 = vmatpush1.msra.mxu0 0.0
      %1731 = vmatprep.subr.mxu0 0.0
      %1732 = vmatpush1.msra.mxu0 0.0
      %1733 = vmatprep.subr.mxu0 0.0
      %1734 = vmatpush1.msra.mxu0 0.0
      %1735 = vmatprep.subr.mxu0 0.0
      %1736 = vmatpush1.msra.mxu0 0.0
      %1737 = vmatprep.subr.mxu0 0.0
      %1738 = vmatpush1.msra.mxu0 0.0
      %1739 = vmatprep.mubr.f32.mxu0 0.0
      %1740 = vmatmul.mubr.f32.gmra.mrb[0].mxu0 %v1575
      %v1741 = vpop.f32.mrb[0].mxu0
      %v1742 = vadd.f32 0.0, %v1741
      %v1743 = vpop.f32.mrb[0].mxu0
      %1744 = vmatprep.mubr.f32.mxu0 0.0
      %1745 = vmatmul.mubr.f32.gmra.mrb[0].mxu0 %v1578
      %v1746 = vpop.f32.mrb[0].mxu0
      %v1747 = vadd.f32 0.0, %v1746
      %v1748 = vpop.f32.mrb[0].mxu0
      %1749 = vmatprep.mubr.f32.mxu0 0.0
      %1750 = vmatmul.mubr.f32.gmra.mrb[0].mxu0 %v1581
      %v1751 = vpop.f32.mrb[0].mxu0
      %v1752 = vadd.f32 0.0, %v1751
      %v1753 = vpop.f32.mrb[0].mxu0
      %1754 = vmatprep.mubr.f32.mxu0 0.0
      %1755 = vmatmul.mubr.f32.gmra.mrb[0].mxu0 %v1584
      %v1756 = vpop.f32.mrb[0].mxu0
      %v1757 = vadd.f32 0.0, %v1756
      %v1758 = vpop.f32.mrb[0].mxu0
      %1759 = vdwg.mxu0
      %v1760 = vadd.f32 %v1534, %v1653
      %v1761 = vadd.f32 %v1535, %v1655
      %v1762 = vadd.f32 %v1536, %v1742
      %v1763 = vadd.f32 %v1537, %v1659
      %v1764 = vadd.f32 %v1538, %v1661
      %v1765 = vadd.f32 %v1539, %v1747
      %v1766 = vadd.f32 %v1540, %v1665
      %v1767 = vadd.f32 %v1541, %v1667
      %v1768 = vadd.f32 %v1542, %v1752
      %v1769 = vadd.f32 %v1543, %v1671
      %v1770 = vadd.f32 %v1544, %v1673
      %v1771 = vadd.f32 %v1545, %v1757
      %s1772 = scalar_lea.vmem %s1, 224
      %v1773 = vld [vmem:[%s1772] sm:$0xff]
      %v1774 = vld [vmem:[%s1772 + $0x8] sm:$0xff]
      %v1775 = vld [vmem:[%s1772 + $0x10] sm:$0xff]
      %v1776 = vld [vmem:[%s1772 + $0x18] sm:$0xff]
      %1777 = vrot.lane.b32.xlu0 %v225, 91
      %v1778 = vpop.permute.xlu0 %1777
      %1779 = vrot.lane.b32.xlu0 %v226, 91
      %v1780 = vpop.permute.xlu0 %1779
      %1781 = vrot.lane.b32.xlu0 %v227, 91
      %v1782 = vpop.permute.xlu0 %1781
      %1783 = vrot.lane.b32.xlu0 %v228, 91
      %v1784 = vpop.permute.xlu0 %1783
      %1785 = vrot.lane.b32.xlu0 %v229, 91
      %v1786 = vpop.permute.xlu0 %1785
      %1787 = vrot.lane.b32.xlu0 %v230, 91
      %v1788 = vpop.permute.xlu0 %1787
      %vm1789 = vcmask 744448
      %v1790 = vsel %vm1789, %v1778, %v1780
      %v1791 = vsel %vm1789, %v1780, %v1782
      %v1792 = vsel %vm1789, %v1784, %v1786
      %v1793 = vsel %vm1789, %v1786, %v1788
      %v1801 = vsel %vm269, %v1773, 0
      %v1804 = vsel %vm269, %v1774, 0
      %v1807 = vsel %vm269, %v1775, 0
      %v1810 = vsel %vm269, %v1776, 0
      %1812 = vmatprep.subr.mxu0 %v1791
      %1813 = vmatpush1.msra.mxu0 %v1790
      %1814 = vmatprep.subr.mxu0 %v1793
      %1815 = vmatpush1.msra.mxu0 %v1792
      %1816 = vmatprep.subr.mxu0 0.0
      %1817 = vmatpush1.msra.mxu0 0.0
      %1818 = vmatprep.subr.mxu0 0.0
      %1819 = vmatpush1.msra.mxu0 0.0
      %1820 = vmatprep.subr.mxu0 0.0
      %1821 = vmatpush1.msra.mxu0 0.0
      %1822 = vmatprep.subr.mxu0 0.0
      %1823 = vmatpush1.msra.mxu0 0.0
      %1824 = vmatprep.subr.mxu0 0.0
      %1825 = vmatpush1.msra.mxu0 0.0
      %1826 = vmatprep.subr.mxu0 0.0
      %1827 = vmatpush1.msra.mxu0 0.0
      %1828 = vmatprep.subr.mxu0 0.0
      %1829 = vmatpush1.msra.mxu0 0.0
      %1830 = vmatprep.subr.mxu0 0.0
      %1831 = vmatpush1.msra.mxu0 0.0
      %1832 = vmatprep.subr.mxu0 0.0
      %1833 = vmatpush1.msra.mxu0 0.0
      %1834 = vmatprep.subr.mxu0 0.0
      %1835 = vmatpush1.msra.mxu0 0.0
      %1836 = vmatprep.subr.mxu0 0.0
      %1837 = vmatpush1.msra.mxu0 0.0
      %1838 = vmatprep.subr.mxu0 0.0
      %1839 = vmatpush1.msra.mxu0 0.0
      %1840 = vmatprep.subr.mxu0 0.0
      %1841 = vmatpush1.msra.mxu0 0.0
      %1842 = vmatprep.subr.mxu0 0.0
      %1843 = vmatpush1.msra.mxu0 0.0
      %1844 = vmatprep.subr.mxu0 0.0
      %1845 = vmatpush1.msra.mxu0 0.0
      %1846 = vmatprep.subr.mxu0 0.0
      %1847 = vmatpush1.msra.mxu0 0.0
      %1848 = vmatprep.subr.mxu0 0.0
      %1849 = vmatpush1.msra.mxu0 0.0
      %1850 = vmatprep.subr.mxu0 0.0
      %1851 = vmatpush1.msra.mxu0 0.0
      %1852 = vmatprep.subr.mxu0 0.0
      %1853 = vmatpush1.msra.mxu0 0.0
      %1854 = vmatprep.subr.mxu0 0.0
      %1855 = vmatpush1.msra.mxu0 0.0
      %1856 = vmatprep.subr.mxu0 0.0
      %1857 = vmatpush1.msra.mxu0 0.0
      %1858 = vmatprep.subr.mxu0 0.0
      %1859 = vmatpush1.msra.mxu0 0.0
      %1860 = vmatprep.subr.mxu0 0.0
      %1861 = vmatpush1.msra.mxu0 0.0
      %1862 = vmatprep.subr.mxu0 0.0
      %1863 = vmatpush1.msra.mxu0 0.0
      %1864 = vmatprep.subr.mxu0 0.0
      %1865 = vmatpush1.msra.mxu0 0.0
      %1866 = vmatprep.subr.mxu0 0.0
      %1867 = vmatpush1.msra.mxu0 0.0
      %1868 = vmatprep.subr.mxu0 0.0
      %1869 = vmatpush1.msra.mxu0 0.0
      %1870 = vmatprep.subr.mxu0 0.0
      %1871 = vmatpush1.msra.mxu0 0.0
      %1872 = vmatprep.subr.mxu0 0.0
      %1873 = vmatpush1.msra.mxu0 0.0
      %1874 = vmatprep.subr.mxu0 0.0
      %1875 = vmatpush1.msra.mxu0 0.0
      %1876 = vmatprep.mubr.f32.mxu0 0.0
      %1877 = vmatmul.mubr.f32.gmra.mrb[0].mxu0 %v1801
      %v1878 = vpop.f32.mrb[0].mxu0
      %v1879 = vadd.f32 0.0, %v1878
      %v1880 = vpop.f32.mrb[0].mxu0
      %v1881 = vadd.f32 0.0, %v1880
      %1882 = vmatprep.mubr.f32.mxu0 0.0
      %1883 = vmatmul.mubr.f32.gmra.mrb[0].mxu0 %v1804
      %v1884 = vpop.f32.mrb[0].mxu0
      %v1885 = vadd.f32 0.0, %v1884
      %v1886 = vpop.f32.mrb[0].mxu0
      %v1887 = vadd.f32 0.0, %v1886
      %1888 = vmatprep.mubr.f32.mxu0 0.0
      %1889 = vmatmul.mubr.f32.gmra.mrb[0].mxu0 %v1807
      %v1890 = vpop.f32.mrb[0].mxu0
      %v1891 = vadd.f32 0.0, %v1890
      %v1892 = vpop.f32.mrb[0].mxu0
      %v1893 = vadd.f32 0.0, %v1892
      %1894 = vmatprep.mubr.f32.mxu0 0.0
      %1895 = vmatmul.mubr.f32.gmra.mrb[0].mxu0 %v1810
      %v1896 = vpop.f32.mrb[0].mxu0
      %v1897 = vadd.f32 0.0, %v1896
      %v1898 = vpop.f32.mrb[0].mxu0
      %v1899 = vadd.f32 0.0, %v1898
      %1900 = vdwg.mxu0
      %1901 = vmatprep.subr.mxu0 0.0
      %1902 = vmatpush1.msra.mxu0 %v1782
      %1903 = vmatprep.subr.mxu0 0.0
      %1904 = vmatpush1.msra.mxu0 %v1788
      %1905 = vmatprep.subr.mxu0 0.0
      %1906 = vmatpush1.msra.mxu0 0.0
      %1907 = vmatprep.subr.mxu0 0.0
      %1908 = vmatpush1.msra.mxu0 0.0
      %1909 = vmatprep.subr.mxu0 0.0
      %1910 = vmatpush1.msra.mxu0 0.0
      %1911 = vmatprep.subr.mxu0 0.0
      %1912 = vmatpush1.msra.mxu0 0.0
      %1913 = vmatprep.subr.mxu0 0.0
      %1914 = vmatpush1.msra.mxu0 0.0
      %1915 = vmatprep.subr.mxu0 0.0
      %1916 = vmatpush1.msra.mxu0 0.0
      %1917 = vmatprep.subr.mxu0 0.0
      %1918 = vmatpush1.msra.mxu0 0.0
      %1919 = vmatprep.subr.mxu0 0.0
      %1920 = vmatpush1.msra.mxu0 0.0
      %1921 = vmatprep.subr.mxu0 0.0
      %1922 = vmatpush1.msra.mxu0 0.0
      %1923 = vmatprep.subr.mxu0 0.0
      %1924 = vmatpush1.msra.mxu0 0.0
      %1925 = vmatprep.subr.mxu0 0.0
      %1926 = vmatpush1.msra.mxu0 0.0
      %1927 = vmatprep.subr.mxu0 0.0
      %1928 = vmatpush1.msra.mxu0 0.0
      %1929 = vmatprep.subr.mxu0 0.0
      %1930 = vmatpush1.msra.mxu0 0.0
      %1931 = vmatprep.subr.mxu0 0.0
      %1932 = vmatpush1.msra.mxu0 0.0
      %1933 = vmatprep.subr.mxu0 0.0
      %1934 = vmatpush1.msra.mxu0 0.0
      %1935 = vmatprep.subr.mxu0 0.0
      %1936 = vmatpush1.msra.mxu0 0.0
      %1937 = vmatprep.subr.mxu0 0.0
      %1938 = vmatpush1.msra.mxu0 0.0
      %1939 = vmatprep.subr.mxu0 0.0
      %1940 = vmatpush1.msra.mxu0 0.0
      %1941 = vmatprep.subr.mxu0 0.0
      %1942 = vmatpush1.msra.mxu0 0.0
      %1943 = vmatprep.subr.mxu0 0.0
      %1944 = vmatpush1.msra.mxu0 0.0
      %1945 = vmatprep.subr.mxu0 0.0
      %1946 = vmatpush1.msra.mxu0 0.0
      %1947 = vmatprep.subr.mxu0 0.0
      %1948 = vmatpush1.msra.mxu0 0.0
      %1949 = vmatprep.subr.mxu0 0.0
      %1950 = vmatpush1.msra.mxu0 0.0
      %1951 = vmatprep.subr.mxu0 0.0
      %1952 = vmatpush1.msra.mxu0 0.0
      %1953 = vmatprep.subr.mxu0 0.0
      %1954 = vmatpush1.msra.mxu0 0.0
      %1955 = vmatprep.subr.mxu0 0.0
      %1956 = vmatpush1.msra.mxu0 0.0
      %1957 = vmatprep.subr.mxu0 0.0
      %1958 = vmatpush1.msra.mxu0 0.0
      %1959 = vmatprep.subr.mxu0 0.0
      %1960 = vmatpush1.msra.mxu0 0.0
      %1961 = vmatprep.subr.mxu0 0.0
      %1962 = vmatpush1.msra.mxu0 0.0
      %1963 = vmatprep.subr.mxu0 0.0
      %1964 = vmatpush1.msra.mxu0 0.0
      %1965 = vmatprep.mubr.f32.mxu0 0.0
      %1966 = vmatmul.mubr.f32.gmra.mrb[0].mxu0 %v1801
      %v1967 = vpop.f32.mrb[0].mxu0
      %v1968 = vadd.f32 0.0, %v1967
      %v1969 = vpop.f32.mrb[0].mxu0
      %1970 = vmatprep.mubr.f32.mxu0 0.0
      %1971 = vmatmul.mubr.f32.gmra.mrb[0].mxu0 %v1804
      %v1972 = vpop.f32.mrb[0].mxu0
      %v1973 = vadd.f32 0.0, %v1972
      %v1974 = vpop.f32.mrb[0].mxu0
      %1975 = vmatprep.mubr.f32.mxu0 0.0
      %1976 = vmatmul.mubr.f32.gmra.mrb[0].mxu0 %v1807
      %v1977 = vpop.f32.mrb[0].mxu0
      %v1978 = vadd.f32 0.0, %v1977
      %v1979 = vpop.f32.mrb[0].mxu0
      %1980 = vmatprep.mubr.f32.mxu0 0.0
      %1981 = vmatmul.mubr.f32.gmra.mrb[0].mxu0 %v1810
      %v1982 = vpop.f32.mrb[0].mxu0
      %v1983 = vadd.f32 0.0, %v1982
      %v1984 = vpop.f32.mrb[0].mxu0
      %1985 = vdwg.mxu0
      %v1986 = vadd.f32 %v1760, %v1879
      %v1987 = vadd.f32 %v1761, %v1881
      %v1988 = vadd.f32 %v1762, %v1968
      %v1989 = vadd.f32 %v1763, %v1885
      %v1990 = vadd.f32 %v1764, %v1887
      %v1991 = vadd.f32 %v1765, %v1973
      %v1992 = vadd.f32 %v1766, %v1891
      %v1993 = vadd.f32 %v1767, %v1893
      %v1994 = vadd.f32 %v1768, %v1978
      %v1995 = vadd.f32 %v1769, %v1897
      %v1996 = vadd.f32 %v1770, %v1899
      %v1997 = vadd.f32 %v1771, %v1983
      %s1998 = scalar_lea.vmem %s1, 256
      %v1999 = vld [vmem:[%s1998] sm:$0xff]
      %v2000 = vld [vmem:[%s1998 + $0x8] sm:$0xff]
      %v2001 = vld [vmem:[%s1998 + $0x10] sm:$0xff]
      %v2002 = vld [vmem:[%s1998 + $0x18] sm:$0xff]
      %2003 = vrot.lane.b32.xlu0 %v225, 90
      %v2004 = vpop.permute.xlu0 %2003
      %2005 = vrot.lane.b32.xlu0 %v226, 90
      %v2006 = vpop.permute.xlu0 %2005
      %2007 = vrot.lane.b32.xlu0 %v227, 90
      %v2008 = vpop.permute.xlu0 %2007
      %2009 = vrot.lane.b32.xlu0 %v228, 90
      %v2010 = vpop.permute.xlu0 %2009
      %2011 = vrot.lane.b32.xlu0 %v229, 90
      %v2012 = vpop.permute.xlu0 %2011
      %2013 = vrot.lane.b32.xlu0 %v230, 90
      %v2014 = vpop.permute.xlu0 %2013
      %vm2015 = vcmask 736256
      %v2016 = vsel %vm2015, %v2004, %v2006
      %v2017 = vsel %vm2015, %v2006, %v2008
      %v2018 = vsel %vm2015, %v2010, %v2012
      %v2019 = vsel %vm2015, %v2012, %v2014
      %v2027 = vsel %vm269, %v1999, 0
      %v2030 = vsel %vm269, %v2000, 0
      %v2033 = vsel %vm269, %v2001, 0
      %v2036 = vsel %vm269, %v2002, 0
      %2038 = vmatprep.subr.mxu0 %v2017
      %2039 = vmatpush1.msra.mxu0 %v2016
      %2040 = vmatprep.subr.mxu0 %v2019
      %2041 = vmatpush1.msra.mxu0 %v2018
      %2042 = vmatprep.subr.mxu0 0.0
      %2043 = vmatpush1.msra.mxu0 0.0
      %2044 = vmatprep.subr.mxu0 0.0
      %2045 = vmatpush1.msra.mxu0 0.0
      %2046 = vmatprep.subr.mxu0 0.0
      %2047 = vmatpush1.msra.mxu0 0.0
      %2048 = vmatprep.subr.mxu0 0.0
      %2049 = vmatpush1.msra.mxu0 0.0
      %2050 = vmatprep.subr.mxu0 0.0
      %2051 = vmatpush1.msra.mxu0 0.0
      %2052 = vmatprep.subr.mxu0 0.0
      %2053 = vmatpush1.msra.mxu0 0.0
      %2054 = vmatprep.subr.mxu0 0.0
      %2055 = vmatpush1.msra.mxu0 0.0
      %2056 = vmatprep.subr.mxu0 0.0
      %2057 = vmatpush1.msra.mxu0 0.0
      %2058 = vmatprep.subr.mxu0 0.0
      %2059 = vmatpush1.msra.mxu0 0.0
      %2060 = vmatprep.subr.mxu0 0.0
      %2061 = vmatpush1.msra.mxu0 0.0
      %2062 = vmatprep.subr.mxu0 0.0
      %2063 = vmatpush1.msra.mxu0 0.0
      %2064 = vmatprep.subr.mxu0 0.0
      %2065 = vmatpush1.msra.mxu0 0.0
      %2066 = vmatprep.subr.mxu0 0.0
      %2067 = vmatpush1.msra.mxu0 0.0
      %2068 = vmatprep.subr.mxu0 0.0
      %2069 = vmatpush1.msra.mxu0 0.0
      %2070 = vmatprep.subr.mxu0 0.0
      %2071 = vmatpush1.msra.mxu0 0.0
      %2072 = vmatprep.subr.mxu0 0.0
      %2073 = vmatpush1.msra.mxu0 0.0
      %2074 = vmatprep.subr.mxu0 0.0
      %2075 = vmatpush1.msra.mxu0 0.0
      %2076 = vmatprep.subr.mxu0 0.0
      %2077 = vmatpush1.msra.mxu0 0.0
      %2078 = vmatprep.subr.mxu0 0.0
      %2079 = vmatpush1.msra.mxu0 0.0
      %2080 = vmatprep.subr.mxu0 0.0
      %2081 = vmatpush1.msra.mxu0 0.0
      %2082 = vmatprep.subr.mxu0 0.0
      %2083 = vmatpush1.msra.mxu0 0.0
      %2084 = vmatprep.subr.mxu0 0.0
      %2085 = vmatpush1.msra.mxu0 0.0
      %2086 = vmatprep.subr.mxu0 0.0
      %2087 = vmatpush1.msra.mxu0 0.0
      %2088 = vmatprep.subr.mxu0 0.0
      %2089 = vmatpush1.msra.mxu0 0.0
      %2090 = vmatprep.subr.mxu0 0.0
      %2091 = vmatpush1.msra.mxu0 0.0
      %2092 = vmatprep.subr.mxu0 0.0
      %2093 = vmatpush1.msra.mxu0 0.0
      %2094 = vmatprep.subr.mxu0 0.0
      %2095 = vmatpush1.msra.mxu0 0.0
      %2096 = vmatprep.subr.mxu0 0.0
      %2097 = vmatpush1.msra.mxu0 0.0
      %2098 = vmatprep.subr.mxu0 0.0
      %2099 = vmatpush1.msra.mxu0 0.0
      %2100 = vmatprep.subr.mxu0 0.0
      %2101 = vmatpush1.msra.mxu0 0.0
      %2102 = vmatprep.mubr.f32.mxu0 0.0
      %2103 = vmatmul.mubr.f32.gmra.mrb[0].mxu0 %v2027
      %v2104 = vpop.f32.mrb[0].mxu0
      %v2105 = vadd.f32 0.0, %v2104
      %v2106 = vpop.f32.mrb[0].mxu0
      %v2107 = vadd.f32 0.0, %v2106
      %2108 = vmatprep.mubr.f32.mxu0 0.0
      %2109 = vmatmul.mubr.f32.gmra.mrb[0].mxu0 %v2030
      %v2110 = vpop.f32.mrb[0].mxu0
      %v2111 = vadd.f32 0.0, %v2110
      %v2112 = vpop.f32.mrb[0].mxu0
      %v2113 = vadd.f32 0.0, %v2112
      %2114 = vmatprep.mubr.f32.mxu0 0.0
      %2115 = vmatmul.mubr.f32.gmra.mrb[0].mxu0 %v2033
      %v2116 = vpop.f32.mrb[0].mxu0
      %v2117 = vadd.f32 0.0, %v2116
      %v2118 = vpop.f32.mrb[0].mxu0
      %v2119 = vadd.f32 0.0, %v2118
      %2120 = vmatprep.mubr.f32.mxu0 0.0
      %2121 = vmatmul.mubr.f32.gmra.mrb[0].mxu0 %v2036
      %v2122 = vpop.f32.mrb[0].mxu0
      %v2123 = vadd.f32 0.0, %v2122
      %v2124 = vpop.f32.mrb[0].mxu0
      %v2125 = vadd.f32 0.0, %v2124
      %2126 = vdwg.mxu0
      %2127 = vmatprep.subr.mxu0 0.0
      %2128 = vmatpush1.msra.mxu0 %v2008
      %2129 = vmatprep.subr.mxu0 0.0
      %2130 = vmatpush1.msra.mxu0 %v2014
      %2131 = vmatprep.subr.mxu0 0.0
      %2132 = vmatpush1.msra.mxu0 0.0
      %2133 = vmatprep.subr.mxu0 0.0
      %2134 = vmatpush1.msra.mxu0 0.0
      %2135 = vmatprep.subr.mxu0 0.0
      %2136 = vmatpush1.msra.mxu0 0.0
      %2137 = vmatprep.subr.mxu0 0.0
      %2138 = vmatpush1.msra.mxu0 0.0
      %2139 = vmatprep.subr.mxu0 0.0
      %2140 = vmatpush1.msra.mxu0 0.0
      %2141 = vmatprep.subr.mxu0 0.0
      %2142 = vmatpush1.msra.mxu0 0.0
      %2143 = vmatprep.subr.mxu0 0.0
      %2144 = vmatpush1.msra.mxu0 0.0
      %2145 = vmatprep.subr.mxu0 0.0
      %2146 = vmatpush1.msra.mxu0 0.0
      %2147 = vmatprep.subr.mxu0 0.0
      %2148 = vmatpush1.msra.mxu0 0.0
      %2149 = vmatprep.subr.mxu0 0.0
      %2150 = vmatpush1.msra.mxu0 0.0
      %2151 = vmatprep.subr.mxu0 0.0
      %2152 = vmatpush1.msra.mxu0 0.0
      %2153 = vmatprep.subr.mxu0 0.0
      %2154 = vmatpush1.msra.mxu0 0.0
      %2155 = vmatprep.subr.mxu0 0.0
      %2156 = vmatpush1.msra.mxu0 0.0
      %2157 = vmatprep.subr.mxu0 0.0
      %2158 = vmatpush1.msra.mxu0 0.0
      %2159 = vmatprep.subr.mxu0 0.0
      %2160 = vmatpush1.msra.mxu0 0.0
      %2161 = vmatprep.subr.mxu0 0.0
      %2162 = vmatpush1.msra.mxu0 0.0
      %2163 = vmatprep.subr.mxu0 0.0
      %2164 = vmatpush1.msra.mxu0 0.0
      %2165 = vmatprep.subr.mxu0 0.0
      %2166 = vmatpush1.msra.mxu0 0.0
      %2167 = vmatprep.subr.mxu0 0.0
      %2168 = vmatpush1.msra.mxu0 0.0
      %2169 = vmatprep.subr.mxu0 0.0
      %2170 = vmatpush1.msra.mxu0 0.0
      %2171 = vmatprep.subr.mxu0 0.0
      %2172 = vmatpush1.msra.mxu0 0.0
      %2173 = vmatprep.subr.mxu0 0.0
      %2174 = vmatpush1.msra.mxu0 0.0
      %2175 = vmatprep.subr.mxu0 0.0
      %2176 = vmatpush1.msra.mxu0 0.0
      %2177 = vmatprep.subr.mxu0 0.0
      %2178 = vmatpush1.msra.mxu0 0.0
      %2179 = vmatprep.subr.mxu0 0.0
      %2180 = vmatpush1.msra.mxu0 0.0
      %2181 = vmatprep.subr.mxu0 0.0
      %2182 = vmatpush1.msra.mxu0 0.0
      %2183 = vmatprep.subr.mxu0 0.0
      %2184 = vmatpush1.msra.mxu0 0.0
      %2185 = vmatprep.subr.mxu0 0.0
      %2186 = vmatpush1.msra.mxu0 0.0
      %2187 = vmatprep.subr.mxu0 0.0
      %2188 = vmatpush1.msra.mxu0 0.0
      %2189 = vmatprep.subr.mxu0 0.0
      %2190 = vmatpush1.msra.mxu0 0.0
      %2191 = vmatprep.mubr.f32.mxu0 0.0
      %2192 = vmatmul.mubr.f32.gmra.mrb[0].mxu0 %v2027
      %v2193 = vpop.f32.mrb[0].mxu0
      %v2194 = vadd.f32 0.0, %v2193
      %v2195 = vpop.f32.mrb[0].mxu0
      %2196 = vmatprep.mubr.f32.mxu0 0.0
      %2197 = vmatmul.mubr.f32.gmra.mrb[0].mxu0 %v2030
      %v2198 = vpop.f32.mrb[0].mxu0
      %v2199 = vadd.f32 0.0, %v2198
      %v2200 = vpop.f32.mrb[0].mxu0
      %2201 = vmatprep.mubr.f32.mxu0 0.0
      %2202 = vmatmul.mubr.f32.gmra.mrb[0].mxu0 %v2033
      %v2203 = vpop.f32.mrb[0].mxu0
      %v2204 = vadd.f32 0.0, %v2203
      %v2205 = vpop.f32.mrb[0].mxu0
      %2206 = vmatprep.mubr.f32.mxu0 0.0
      %2207 = vmatmul.mubr.f32.gmra.mrb[0].mxu0 %v2036
      %v2208 = vpop.f32.mrb[0].mxu0
      %v2209 = vadd.f32 0.0, %v2208
      %v2210 = vpop.f32.mrb[0].mxu0
      %2211 = vdwg.mxu0
      %v2212 = vadd.f32 %v1986, %v2105
      %v2213 = vadd.f32 %v1987, %v2107
      %v2214 = vadd.f32 %v1988, %v2194
      %v2215 = vadd.f32 %v1989, %v2111
      %v2216 = vadd.f32 %v1990, %v2113
      %v2217 = vadd.f32 %v1991, %v2199
      %v2218 = vadd.f32 %v1992, %v2117
      %v2219 = vadd.f32 %v1993, %v2119
      %v2220 = vadd.f32 %v1994, %v2204
      %v2221 = vadd.f32 %v1995, %v2123
      %v2222 = vadd.f32 %v1996, %v2125
      %v2223 = vadd.f32 %v1997, %v2209
      %v2224 = vld [vmem:[%s2] sm:$0xff]
      %v2225 = vld [vmem:[%s2 + $0x8] sm:$0xff]
      %v2226 = vld [vmem:[%s2 + $0x10] sm:$0xff]
      %v2227 = vld [vmem:[%s2 + $0x18] sm:$0xff]
      %2229 = vset.pattern.permute.xlu0 0
      %2230 = vperm.xlu0 %2229, %v2224
      %v2231 = vpop.permute.xlu0 %2230
      %2234 = vset.pattern.permute.xlu0 0
      %2235 = vperm.xlu0 %2234, %v2225
      %v2236 = vpop.permute.xlu0 %2235
      %2239 = vset.pattern.permute.xlu0 0
      %2240 = vperm.xlu0 %2239, %v2226
      %v2241 = vpop.permute.xlu0 %2240
      %2244 = vset.pattern.permute.xlu0 0
      %2245 = vperm.xlu0 %2244, %v2227
      %v2246 = vpop.permute.xlu0 %2245
      %v2248 = vadd.f32 %v2212, %v2231
      %v2249 = vadd.f32 %v2213, %v2231
      %v2250 = vadd.f32 %v2214, %v2231
      %v2251 = vadd.f32 %v2215, %v2236
      %v2252 = vadd.f32 %v2216, %v2236
      %v2253 = vadd.f32 %v2217, %v2236
      %v2254 = vadd.f32 %v2218, %v2241
      %v2255 = vadd.f32 %v2219, %v2241
      %v2256 = vadd.f32 %v2220, %v2241
      %v2257 = vadd.f32 %v2221, %v2246
      %v2258 = vadd.f32 %v2222, %v2246
      %v2259 = vadd.f32 %v2223, %v2246
      %2272 = vrot.lane.b32.xlu0 %v2248, 127
      %v2273 = vpop.permute.xlu0 %2272
      %2274 = vrot.lane.b32.xlu0 %v2249, 127
      %v2275 = vpop.permute.xlu0 %2274
      %2276 = vrot.lane.b32.xlu0 %v2250, 127
      %v2277 = vpop.permute.xlu0 %2276
      %2278 = vrot.lane.b32.xlu0 %v2251, 127
      %v2279 = vpop.permute.xlu0 %2278
      %2280 = vrot.lane.b32.xlu0 %v2252, 127
      %v2281 = vpop.permute.xlu0 %2280
      %2282 = vrot.lane.b32.xlu0 %v2253, 127
      %v2283 = vpop.permute.xlu0 %2282
      %2284 = vrot.lane.b32.xlu0 %v2254, 127
      %v2285 = vpop.permute.xlu0 %2284
      %2286 = vrot.lane.b32.xlu0 %v2255, 127
      %v2287 = vpop.permute.xlu0 %2286
      %2288 = vrot.lane.b32.xlu0 %v2256, 127
      %v2289 = vpop.permute.xlu0 %2288
      %2290 = vrot.lane.b32.xlu0 %v2257, 127
      %v2291 = vpop.permute.xlu0 %2290
      %2292 = vrot.lane.b32.xlu0 %v2258, 127
      %v2293 = vpop.permute.xlu0 %2292
      %2294 = vrot.lane.b32.xlu0 %v2259, 127
      %v2295 = vpop.permute.xlu0 %2294
      %v2296 = vsel %vm258, %v2273, %v2275
      %v2297 = vsel %vm258, %v2275, %v2277
      %v2298 = vsel %vm258, %v2279, %v2281
      %v2299 = vsel %vm258, %v2281, %v2283
      %v2300 = vsel %vm258, %v2285, %v2287
      %v2301 = vsel %vm258, %v2287, %v2289
      %v2302 = vsel %vm258, %v2291, %v2293
      %v2303 = vsel %vm258, %v2293, %v2295
      %v2316 = vmax.f32 %v2248, %v2296
      %v2317 = vmax.f32 %v2249, %v2297
      %v2318 = vmax.f32 %v2250, %v2277
      %v2319 = vmax.f32 %v2251, %v2298
      %v2320 = vmax.f32 %v2252, %v2299
      %v2321 = vmax.f32 %v2253, %v2283
      %v2322 = vmax.f32 %v2254, %v2300
      %v2323 = vmax.f32 %v2255, %v2301
      %v2324 = vmax.f32 %v2256, %v2289
      %v2325 = vmax.f32 %v2257, %v2302
      %v2326 = vmax.f32 %v2258, %v2303
      %v2327 = vmax.f32 %v2259, %v2295
      %2340 = vrot.lane.b32.xlu0 %v2316, 110
      %v2341 = vpop.permute.xlu0 %2340
      %2342 = vrot.lane.b32.xlu0 %v2317, 110
      %v2343 = vpop.permute.xlu0 %2342
      %2344 = vrot.lane.b32.xlu0 %v2318, 110
      %v2345 = vpop.permute.xlu0 %2344
      %2346 = vrot.lane.b32.xlu0 %v2319, 110
      %v2347 = vpop.permute.xlu0 %2346
      %2348 = vrot.lane.b32.xlu0 %v2320, 110
      %v2349 = vpop.permute.xlu0 %2348
      %2350 = vrot.lane.b32.xlu0 %v2321, 110
      %v2351 = vpop.permute.xlu0 %2350
      %2352 = vrot.lane.b32.xlu0 %v2322, 110
      %v2353 = vpop.permute.xlu0 %2352
      %2354 = vrot.lane.b32.xlu0 %v2323, 110
      %v2355 = vpop.permute.xlu0 %2354
      %2356 = vrot.lane.b32.xlu0 %v2324, 110
      %v2357 = vpop.permute.xlu0 %2356
      %2358 = vrot.lane.b32.xlu0 %v2325, 110
      %v2359 = vpop.permute.xlu0 %2358
      %2360 = vrot.lane.b32.xlu0 %v2326, 110
      %v2361 = vpop.permute.xlu0 %2360
      %2362 = vrot.lane.b32.xlu0 %v2327, 110
      %v2363 = vpop.permute.xlu0 %2362
      %v2364 = vsel %vm885, %v2341, %v2343
      %v2365 = vsel %vm885, %v2343, %v2345
      %v2366 = vsel %vm885, %v2347, %v2349
      %v2367 = vsel %vm885, %v2349, %v2351
      %v2368 = vsel %vm885, %v2353, %v2355
      %v2369 = vsel %vm885, %v2355, %v2357
      %v2370 = vsel %vm885, %v2359, %v2361
      %v2371 = vsel %vm885, %v2361, %v2363
      %v2384 = vmax.f32 %v2316, %v2364
      %v2385 = vmax.f32 %v2317, %v2365
      %v2386 = vmax.f32 %v2318, %v2345
      %v2387 = vmax.f32 %v2319, %v2366
      %v2388 = vmax.f32 %v2320, %v2367
      %v2389 = vmax.f32 %v2321, %v2351
      %v2390 = vmax.f32 %v2322, %v2368
      %v2391 = vmax.f32 %v2323, %v2369
      %v2392 = vmax.f32 %v2324, %v2357
      %v2393 = vmax.f32 %v2325, %v2370
      %v2394 = vmax.f32 %v2326, %v2371
      %v2395 = vmax.f32 %v2327, %v2363
      %vm2396 = vcmp.ge.f32.partialorder %v2384, 0.0
      %vm2397 = vcmp.ge.f32.partialorder %v2385, 0.0
      %vm2398 = vcmp.ge.f32.partialorder %v2386, 0.0
      %vm2399 = vcmp.ge.f32.partialorder %v2387, 0.0
      %vm2400 = vcmp.ge.f32.partialorder %v2388, 0.0
      %vm2401 = vcmp.ge.f32.partialorder %v2389, 0.0
      %vm2402 = vcmp.ge.f32.partialorder %v2390, 0.0
      %vm2403 = vcmp.ge.f32.partialorder %v2391, 0.0
      %vm2404 = vcmp.ge.f32.partialorder %v2392, 0.0
      %vm2405 = vcmp.ge.f32.partialorder %v2393, 0.0
      %vm2406 = vcmp.ge.f32.partialorder %v2394, 0.0
      %vm2407 = vcmp.ge.f32.partialorder %v2395, 0.0
      %v2408 = vmul.f32 %v2384, 0.2
      %v2409 = vmul.f32 %v2385, 0.2
      %v2410 = vmul.f32 %v2386, 0.2
      %v2411 = vmul.f32 %v2387, 0.2
      %v2412 = vmul.f32 %v2388, 0.2
      %v2413 = vmul.f32 %v2389, 0.2
      %v2414 = vmul.f32 %v2390, 0.2
      %v2415 = vmul.f32 %v2391, 0.2
      %v2416 = vmul.f32 %v2392, 0.2
      %v2417 = vmul.f32 %v2393, 0.2
      %v2418 = vmul.f32 %v2394, 0.2
      %v2419 = vmul.f32 %v2395, 0.2
      %v2420 = vsel %vm2396, %v2384, %v2408
      %v2421 = vsel %vm2397, %v2385, %v2409
      %v2422 = vsel %vm2398, %v2386, %v2410
      %v2423 = vsel %vm2399, %v2387, %v2411
      %v2424 = vsel %vm2400, %v2388, %v2412
      %v2425 = vsel %vm2401, %v2389, %v2413
      %v2426 = vsel %vm2402, %v2390, %v2414
      %v2427 = vsel %vm2403, %v2391, %v2415
      %v2428 = vsel %vm2404, %v2392, %v2416
      %v2429 = vsel %vm2405, %v2393, %v2417
      %v2430 = vsel %vm2406, %v2394, %v2418
      %v2431 = vsel %vm2407, %v2395, %v2419
      %v2432 = vld [vmem:[%s3] sm:$0xff]
      %v2433 = vld [vmem:[%s3 + $0x8] sm:$0xff]
      %v2434 = vld [vmem:[%s3 + $0x10] sm:$0xff]
      %v2435 = vld [vmem:[%s3 + $0x18] sm:$0xff]
      %2437 = vset.pattern.permute.xlu0 0
      %2438 = vperm.xlu0 %2437, %v2432
      %v2439 = vpop.permute.xlu0 %2438
      %2442 = vset.pattern.permute.xlu0 0
      %2443 = vperm.xlu0 %2442, %v2433
      %v2444 = vpop.permute.xlu0 %2443
      %2447 = vset.pattern.permute.xlu0 0
      %2448 = vperm.xlu0 %2447, %v2434
      %v2449 = vpop.permute.xlu0 %2448
      %2452 = vset.pattern.permute.xlu0 0
      %2453 = vperm.xlu0 %2452, %v2435
      %v2454 = vpop.permute.xlu0 %2453
      %v2456 = vmul.f32 %v2420, %v2439
      %v2457 = vmul.f32 %v2421, %v2439
      %v2458 = vmul.f32 %v2422, %v2439
      %v2459 = vmul.f32 %v2423, %v2444
      %v2460 = vmul.f32 %v2424, %v2444
      %v2461 = vmul.f32 %v2425, %v2444
      %v2462 = vmul.f32 %v2426, %v2449
      %v2463 = vmul.f32 %v2427, %v2449
      %v2464 = vmul.f32 %v2428, %v2449
      %v2465 = vmul.f32 %v2429, %v2454
      %v2466 = vmul.f32 %v2430, %v2454
      %v2467 = vmul.f32 %v2431, %v2454
      %v2468 = vld [vmem:[%s4] sm:$0xff]
      %v2469 = vld [vmem:[%s4 + $0x8] sm:$0xff]
      %v2470 = vld [vmem:[%s4 + $0x10] sm:$0xff]
      %v2471 = vld [vmem:[%s4 + $0x18] sm:$0xff]
      %2473 = vset.pattern.permute.xlu0 0
      %2474 = vperm.xlu0 %2473, %v2468
      %v2475 = vpop.permute.xlu0 %2474
      %2478 = vset.pattern.permute.xlu0 0
      %2479 = vperm.xlu0 %2478, %v2469
      %v2480 = vpop.permute.xlu0 %2479
      %2483 = vset.pattern.permute.xlu0 0
      %2484 = vperm.xlu0 %2483, %v2470
      %v2485 = vpop.permute.xlu0 %2484
      %2488 = vset.pattern.permute.xlu0 0
      %2489 = vperm.xlu0 %2488, %v2471
      %v2490 = vpop.permute.xlu0 %2489
      %v2492 = vadd.f32 %v2456, %v2475
      %v2493 = vadd.f32 %v2457, %v2475
      %v2494 = vadd.f32 %v2458, %v2475
      %v2495 = vadd.f32 %v2459, %v2480
      %v2496 = vadd.f32 %v2460, %v2480
      %v2497 = vadd.f32 %v2461, %v2480
      %v2498 = vadd.f32 %v2462, %v2485
      %v2499 = vadd.f32 %v2463, %v2485
      %v2500 = vadd.f32 %v2464, %v2485
      %v2501 = vadd.f32 %v2465, %v2490
      %v2502 = vadd.f32 %v2466, %v2490
      %v2503 = vadd.f32 %v2467, %v2490
      %2504 = vst [vmem:[%s224] sm:$0xff] %v2492
      %2505 = vst [vmem:[%s224 + $0x8] sm:$0xff] %v2493
      %vm2506 = vcmask 261120
      %2507 = vst.msk [vmem:[%s224 + $0x10] sm:$0xff] %vm2506, %v2494
      %2508 = vst [vmem:[%s224 + $0x18] sm:$0xff] %v2495
      %2509 = vst [vmem:[%s224 + $0x20] sm:$0xff] %v2496
      %2510 = vst.msk [vmem:[%s224 + $0x28] sm:$0xff] %vm2506, %v2497
      %2511 = vst [vmem:[%s224 + $0x30] sm:$0xff] %v2498
      %2512 = vst [vmem:[%s224 + $0x38] sm:$0xff] %v2499
      %2513 = vst.msk [vmem:[%s224 + $0x40] sm:$0xff] %vm2506, %v2500
      %2514 = vst [vmem:[%s224 + $0x48] sm:$0xff] %v2501
      %2515 = vst [vmem:[%s224 + $0x50] sm:$0xff] %v2502
      %2516 = vst.msk [vmem:[%s224 + $0x58] sm:$0xff] %vm2506, %v2503
      %p2517 = scmp.lt.s32.totalorder %s16, 1
      %s2518 = scalar_select %p2517, %s16, 1
      %s2519 = smul.addr %s2518, 12
      %s2520 = smul.addr %s2519, 8
      %s2521 = scalar_lea.vmem %s5, %s2520
      // Predicated region
      $region41: #{disc_conv_forward.3} parent=39 // pred_check
        %p2522 = pneg %p144
      $region42: #{disc_conv_forward.3} parent=39 // pred_check_branch
        %2524 = sbr.rel (%p2522) target = $region44
      $region43: #{disc_conv_forward.3} parent=39 // pred_region
        _
      $region44: #{disc_conv_forward.3} parent=39 // pred_fallthru
        _
    $region40: #{disc_conv_forward.3} parent=5 // pred_fallthru
      _
    %p2525 = scmp.le.s32.totalorder 2, %s11
    // Predicated region
    $region45: #{disc_conv_forward.3} parent=5 // pred_check
      %p2526 = pneg %p2525
    $region46: #{disc_conv_forward.3} parent=5 // pred_check_branch
      %2528 = sbr.rel (%p2526) target = $region48
    $region47: #{disc_conv_forward.3} parent=5 // pred_region
      %s2529 = ssub.s32 %s11, 2
      // Predicated region
      $region49: #{disc_conv_forward.3} parent=47 // pred_check
        %p2530 = pneg %p150
      $region50: #{disc_conv_forward.3} parent=47 // pred_check_branch
        %2532 = sbr.rel (%p2530) target = $region52
      $region51: #{disc_conv_forward.3} parent=47 // pred_region
        %p2533 = scmp.lt.s32.totalorder %s17, 1
        %s2534 = scalar_select %p2533, %s17, 1
        %s2535 = smul.addr %s2534, 12
        %s2536 = smul.addr %s2535, 8
        %s2537 = scalar_lea.vmem %s5, %s2536
      $region52: #{disc_conv_forward.3} parent=47 // pred_fallthru
        _
    $region48: #{disc_conv_forward.3} parent=5 // pred_fallthru
      _
  $region6: #{disc_conv_forward.3} parent=0 // loop_footer
    %s15 = sadd.s32 1, %s11
  $region7: #{disc_conv_forward.3} parent=0 // loop_footer_branch
    %10 = sbr.rel target = $region3
  $region8: #{disc_conv_forward.3} parent=0 // loop_exit
    _

</llo_original>
